<compile_context>
chip_gen: v5e
topology: v5e:2x2
jax: 0.10.0
libtpu: 0.0.40
codegen_flags: <defaults>
</compile_context>

<pallas_src>
import functools

import jax
import jax.numpy as jnp
from jax.experimental import pallas as pl
from jax.experimental.pallas import tpu as pltpu

NUM_GROUPS = 32
GN_EPS = 1e-5


# ---------------------------------------------------------------------------
# Helpers
# ---------------------------------------------------------------------------
def _pick_tile(s, pref, granules=(256, 128, 16, 8, 1)):
    """Largest divisor of s that is <= pref, preferring MXU-friendly multiples
    of 256/128, then 16 (bf16 sublane packing), then 8.  Never returns a tile
    larger than pref when s > pref (guards against giant full-S tiles)."""
    if s <= pref:
        return s
    for g in granules:
        start = (pref // g) * g
        for t in range(start, 0, -g):
            if t > 0 and s % t == 0:
                return t
    return pref  # unreachable: g == 1 always finds a divisor


def _vmem_limit_bytes():
    """Scoped-VMEM limit sized from the running generation (64 MiB/TC on v7x,
    128 MiB on v5e/v6e), leaving ~25% headroom for compiler scratch."""
    cap = 128 << 20
    try:
        cap = int(pltpu.get_tpu_info().vmem_capacity_bytes)
    except Exception:
        pass
    if cap <= 0:
        cap = 128 << 20
    return int(min(max(cap * 3 // 4, 32 << 20), 100 << 20))


def _kv_resident_fits(S, C, tq, cdt_bytes, out_bytes, budget):
    """Conservative VMEM estimate for the resident-KV single-pass path."""
    kv = 2 * (2 * S * C * cdt_bytes)                 # K + V blocks, double-buffered
    per_q = 2 * tq * C * (cdt_bytes + 4 + out_bytes)  # q / x(f32) / out, double-buffered
    weights = C * C * cdt_bytes + 4 * C               # wo + bo (single-buffered)
    temps = 2 * tq * S * 4 + 2 * tq * C * 4           # scores+probs f32, attn f32
    return kv + per_q + weights + temps <= int(budget * 0.8)


def _probe_single_buffer_kernel(w_ref, o_ref):
    o_ref[...] = w_ref[...] + 1.0


@functools.lru_cache(maxsize=None)
def _single_buffer_kwargs():
    """BlockSpec kwargs that drop the dead second buffer of grid-invariant
    operands (pipeline_mode=pl.Buffered(1)).  Probed once on a tiny kernel so
    unsupported jax versions fall back to default double-buffering instead of
    failing the real kernels."""
    if not hasattr(pl, "Buffered"):
        return {}
    kw = {"pipeline_mode": pl.Buffered(1)}
    try:
        out = pl.pallas_call(
            _probe_single_buffer_kernel,
            out_shape=jax.ShapeDtypeStruct((16, 128), jnp.float32),
            grid_spec=pltpu.PrefetchScalarGridSpec(
                num_scalar_prefetch=0,
                grid=(2,),
                in_specs=[pl.BlockSpec((8, 128), lambda i: (0, 0), **kw)],
                out_specs=pl.BlockSpec((8, 128), lambda i: (i, 0)),
            ),
        )(jnp.zeros((8, 128), jnp.float32))
        jax.block_until_ready(out)
        return kw
    except Exception:
        return {}


# ---------------------------------------------------------------------------
# Kernel 1: GroupNorm affine + q/k/v projections (three split MXU dots)
# ---------------------------------------------------------------------------
def _gn_qkv_proj_kernel(x_ref, scale_ref, shift_ref,
                        wq_ref, wk_ref, wv_ref, bq_ref, bk_ref, bv_ref,
                        q_ref, k_ref, v_ref):
    # GroupNorm statistics are pre-folded into (scale, shift); h in compute dtype.
    h = (x_ref[0] * scale_ref[0] + shift_ref[0]).astype(wq_ref.dtype)

    def proj(w_ref, b_ref, o_ref):
        # (ts, C) @ (C, C) on the MXU, f32 accumulation, bias add, direct store:
        # avoids any (ts, 3C) f32 intermediate.
        o_ref[0] = (jax.lax.dot_general(
            h, w_ref[...],
            dimension_numbers=(((1,), (0,)), ((), ())),
            preferred_element_type=jnp.float32) + b_ref[...]).astype(o_ref.dtype)

    proj(wq_ref, bq_ref, q_ref)
    proj(wk_ref, bk_ref, k_ref)
    proj(wv_ref, bv_ref, v_ref)


# ---------------------------------------------------------------------------
# Kernel 2a: resident-KV single-pass attention + out-proj + residual
# ---------------------------------------------------------------------------
def _attn_out_single_kernel(q_ref, k_ref, v_ref, x_ref, wo_ref, bo_ref, o_ref,
                            *, approx_recip):
    q = q_ref[0]                      # (tq, C); softmax scale folded into wq
    k = k_ref[0]                      # (S, C)  resident for the whole batch
    v = v_ref[0]                      # (S, C)
    # Scores: contract last dims of both operands (no explicit k.T / XLU pass).
    s = jax.lax.dot_general(
        q, k, dimension_numbers=(((1,), (1,)), ((), ())),
        preferred_element_type=jnp.float32)                       # (tq, S) f32
    m = jnp.max(s, axis=-1, keepdims=True)
    p = jnp.exp(s - m)
    l = jnp.sum(p, axis=-1, keepdims=True)
    acc = jax.lax.dot_general(
        p.astype(v.dtype), v, dimension_numbers=(((1,), (0,)), ((), ())),
        preferred_element_type=jnp.float32)                       # (tq, C) f32
    attn = (acc * pl.reciprocal(l, approx=approx_recip)).astype(wo_ref.dtype)
    out = jax.lax.dot_general(
        attn, wo_ref[...], dimension_numbers=(((1,), (0,)), ((), ())),
        preferred_element_type=jnp.float32)
    o_ref[0] = (x_ref[0] + out + bo_ref[...]).astype(o_ref.dtype)


# ---------------------------------------------------------------------------
# Kernel 2b: flash attention (online softmax) + out-proj + residual
# ---------------------------------------------------------------------------
def _flash_attn_out_kernel(q_ref, k_ref, v_ref, x_ref, wo_ref, bo_ref,
                           o_ref, m_scr, l_scr, acc_scr, *, approx_recip):
    kv = pl.program_id(2)

    @pl.when(kv == 0)
    def _():
        m_scr[...] = jnp.full_like(m_scr, -jnp.inf)
        l_scr[...] = jnp.zeros_like(l_scr)
        acc_scr[...] = jnp.zeros_like(acc_scr)

    q = q_ref[0]                      # (tq, C); softmax scale folded into wq
    k = k_ref[0]                      # (tk, C)
    v = v_ref[0]                      # (tk, C)

    s = jax.lax.dot_general(
        q, k, dimension_numbers=(((1,), (1,)), ((), ())),
        preferred_element_type=jnp.float32)                       # (tq, tk) f32

    m_prev = m_scr[...]                                           # (tq, 1)
    m_new = jnp.maximum(m_prev, jnp.max(s, axis=-1, keepdims=True))
    alpha = jnp.exp(m_prev - m_new)
    p = jnp.exp(s - m_new)
    l_scr[...] = alpha * l_scr[...] + jnp.sum(p, axis=-1, keepdims=True)
    acc_scr[...] = alpha * acc_scr[...] + jax.lax.dot_general(
        p.astype(v.dtype), v, dimension_numbers=(((1,), (0,)), ((), ())),
        preferred_element_type=jnp.float32)
    m_scr[...] = m_new

    @pl.when(kv == pl.num_programs(2) - 1)
    def _():
        inv_l = pl.reciprocal(l_scr[...], approx=approx_recip)
        attn = (acc_scr[...] * inv_l).astype(wo_ref.dtype)
        out = jax.lax.dot_general(
            attn, wo_ref[...], dimension_numbers=(((1,), (0,)), ((), ())),
            preferred_element_type=jnp.float32)
        o_ref[0] = (x_ref[0] + out + bo_ref[...]).astype(o_ref.dtype)


# ---------------------------------------------------------------------------
# Wrapper
# ---------------------------------------------------------------------------
def attn_block_pallas(x_nchw, params, *, compute_dtype=jnp.bfloat16,
                      out_dtype=None, q_tile=512, kv_tile=512, proj_tile=512,
                      kv_resident=None):
    """x_nchw: (B, C, H, W).  Returns (B, C, H, W) matching AttnBlock.forward."""
    B, C, H, W = x_nchw.shape
    S = H * W
    G = NUM_GROUPS
    assert C % G == 0, "GroupNorm(32, C) requires C % 32 == 0"
    Cg = C // G
    out_dtype = x_nchw.dtype if out_dtype is None else out_dtype

    vmem_limit = _vmem_limit_bytes()
    single_buf = _single_buffer_kwargs()

    # ---- GroupNorm statistics on NCHW (channel rows contiguous), folded with
    # gamma/beta into a per-(B, C) affine -------------------------------------
    xf = x_nchw.astype(jnp.float32)
    xg = xf.reshape(B, G, Cg * H * W)
    mean_g = jnp.mean(xg, axis=-1)                                     # (B, G)
    var_g = jnp.mean(jnp.square(xg - mean_g[:, :, None]), axis=-1)     # (B, G)
    rstd_g = jax.lax.rsqrt(var_g + GN_EPS)
    mean_c = jnp.repeat(mean_g, Cg, axis=1)                            # (B, C)
    rstd_c = jnp.repeat(rstd_g, Cg, axis=1)                            # (B, C)
    gamma = params["gn_gamma"].astype(jnp.float32)
    beta = params["gn_beta"].astype(jnp.float32)
    gn_scale = (gamma[None, :] * rstd_c)[:, None, :]                   # (B,1,C)
    gn_shift = (beta[None, :] - mean_c * gamma[None, :] * rstd_c)[:, None, :]

    # NCHW -> (B, S, C): 1x1 convs become lane-dense (S, C) @ (C, C') matmuls.
    # TODO(synk): if the surrounding model can stay NHWC, this transpose and
    # the one at the end can be dropped (saves ~2 full-tensor HBM passes).
    x_bsc = jnp.transpose(x_nchw, (0, 2, 3, 1)).reshape(B, S, C)

    # ---- conv weights (C_out, C_in, 1, 1) -> (C_in, C_out); fold the softmax
    # scale C**-0.5 into wq / bq ----------------------------------------------
    scale = jnp.float32(C) ** -0.5
    wq = (params["wq"].reshape(C, C).T * scale).astype(compute_dtype)
    wk = params["wk"].reshape(C, C).T.astype(compute_dtype)
    wv = params["wv"].reshape(C, C).T.astype(compute_dtype)
    wo = params["wo"].reshape(C, C).T.astype(compute_dtype)
    bq = (params["bq"].astype(jnp.float32) * scale).reshape(1, C)
    bk = params["bk"].astype(jnp.float32).reshape(1, C)
    bv = params["bv"].astype(jnp.float32).reshape(1, C)
    bo = params["bo"].astype(jnp.float32).reshape(1, C)

    # ---- kernel 1: GroupNorm affine + q/k/v projections ----------------------
    ts = _pick_tile(S, proj_tile)
    w_spec = pl.BlockSpec((C, C), lambda b, i: (0, 0), **single_buf)
    b_spec = pl.BlockSpec((1, C), lambda b, i: (0, 0), **single_buf)
    qkv_out_spec = pl.BlockSpec((1, ts, C), lambda b, i: (b, i, 0))
    q, k, v = pl.pallas_call(
        _gn_qkv_proj_kernel,
        out_shape=tuple(jax.ShapeDtypeStruct((B, S, C), compute_dtype)
                        for _ in range(3)),
        grid_spec=pltpu.PrefetchScalarGridSpec(
            num_scalar_prefetch=0,
            grid=(B, S // ts),
            in_specs=[
                pl.BlockSpec((1, ts, C), lambda b, i: (b, i, 0)),   # x
                pl.BlockSpec((1, 1, C), lambda b, i: (b, 0, 0)),    # gn scale
                pl.BlockSpec((1, 1, C), lambda b, i: (b, 0, 0)),    # gn shift
                w_spec, w_spec, w_spec,                             # wq, wk, wv
                b_spec, b_spec, b_spec,                             # bq, bk, bv
            ],
            out_specs=(qkv_out_spec, qkv_out_spec, qkv_out_spec),
        ),
        compiler_params=pltpu.CompilerParams(
            dimension_semantics=("parallel", "parallel"),
            vmem_limit_bytes=vmem_limit),
    )(x_bsc, gn_scale, gn_shift, wq, wk, wv, bq, bk, bv)

    # ---- kernel 2: attention + out-proj + residual ---------------------------
    tq = _pick_tile(S, q_tile)
    # v7x has 2 TensorCores: keep >= 2 parallel grid steps when possible.
    if B * (S // tq) < 2 and tq % 16 == 0 and S % (tq // 2) == 0:
        tq //= 2

    cdt_bytes = jnp.dtype(compute_dtype).itemsize
    out_bytes = jnp.dtype(out_dtype).itemsize
    if kv_resident is None:
        kv_resident = _kv_resident_fits(S, C, tq, cdt_bytes, out_bytes, vmem_limit)
    approx = jnp.dtype(compute_dtype) != jnp.dtype(jnp.float32)

    if kv_resident:
        # K/V are DMA'd once per batch; no online-softmax rescale needed.
        kernel = functools.partial(_attn_out_single_kernel, approx_recip=approx)
        grid = (B, S // tq)
        in_specs = [
            pl.BlockSpec((1, tq, C), lambda b, i: (b, i, 0)),              # q
            pl.BlockSpec((1, S, C), lambda b, i: (b, 0, 0)),               # k
            pl.BlockSpec((1, S, C), lambda b, i: (b, 0, 0)),               # v
            pl.BlockSpec((1, tq, C), lambda b, i: (b, i, 0)),              # x
            pl.BlockSpec((C, C), lambda b, i: (0, 0), **single_buf),       # wo
            pl.BlockSpec((1, C), lambda b, i: (0, 0), **single_buf),       # bo
        ]
        out_spec = pl.BlockSpec((1, tq, C), lambda b, i: (b, i, 0))
        scratch = []
        dims = ("parallel", "parallel")
    else:
        tk = _pick_tile(S, kv_tile)
        kernel = functools.partial(_flash_attn_out_kernel, approx_recip=approx)
        grid = (B, S // tq, S // tk)
        in_specs = [
            pl.BlockSpec((1, tq, C), lambda b, i, j: (b, i, 0)),           # q
            pl.BlockSpec((1, tk, C), lambda b, i, j: (b, j, 0)),           # k
            pl.BlockSpec((1, tk, C), lambda b, i, j: (b, j, 0)),           # v
            pl.BlockSpec((1, tq, C), lambda b, i, j: (b, i, 0)),           # x
            pl.BlockSpec((C, C), lambda b, i, j: (0, 0), **single_buf),    # wo
            pl.BlockSpec((1, C), lambda b, i, j: (0, 0), **single_buf),    # bo
        ]
        out_spec = pl.BlockSpec((1, tq, C), lambda b, i, j: (b, i, 0))
        scratch = [pltpu.VMEM((tq, 1), jnp.float32),    # running max m
                   pltpu.VMEM((tq, 1), jnp.float32),    # running sum l
                   pltpu.VMEM((tq, C), jnp.float32)]    # output accumulator
        dims = ("parallel", "parallel", "arbitrary")

    out_bsc = pl.pallas_call(
        kernel,
        out_shape=jax.ShapeDtypeStruct((B, S, C), out_dtype),
        grid_spec=pltpu.PrefetchScalarGridSpec(
            num_scalar_prefetch=0,
            grid=grid,
            in_specs=in_specs,
            out_specs=out_spec,
            scratch_shapes=scratch,
        ),
        compiler_params=pltpu.CompilerParams(
            dimension_semantics=dims,
            vmem_limit_bytes=vmem_limit),
    )(q, k, v, x_bsc, wo, bo)

    # (B, S, C) -> NCHW
    return jnp.transpose(out_bsc.reshape(B, H, W, C), (0, 3, 1, 2))


# ---------------------------------------------------------------------------
# Pure-JAX reference (matches the PyTorch forward, NCHW, f32)
# ---------------------------------------------------------------------------
def attn_block_ref(x, params):
    B, C, H, W = x.shape
    G = NUM_GROUPS
    xg = x.reshape(B, G, C // G, H, W)
    mean = xg.mean(axis=(2, 3, 4), keepdims=True)
    var = xg.var(axis=(2, 3, 4), keepdims=True)
    h = ((xg - mean) / jnp.sqrt(var + GN_EPS)).reshape(B, C, H, W)
    h = h * params["gn_gamma"][None, :, None, None] + params["gn_beta"][None, :, None, None]

    def conv1x1(t, w, b):
        wm = w.reshape(C, C)  # (C_out, C_in)
        return jnp.einsum("oi,bihw->bohw", wm, t) + b[None, :, None, None]

    q = conv1x1(h, params["wq"], params["bq"])
    k = conv1x1(h, params["wk"], params["bk"])
    v = conv1x1(h, params["wv"], params["bv"])
    q = jnp.transpose(q, (0, 2, 3, 1)).reshape(B, H * W, C)
    k = k.reshape(B, C, H * W)
    w = jnp.einsum("bsc,bct->bst", q, k) * (C ** -0.5)
    w = jax.nn.softmax(w, axis=-1)
    v = jnp.transpose(v, (0, 2, 3, 1)).reshape(B, H * W, C)
    hout = jnp.einsum("bst,btc->bsc", w, v)
    hout = jnp.transpose(hout.reshape(B, H, W, C), (0, 3, 1, 2))
    hout = conv1x1(hout, params["wo"], params["bo"])
    return x + hout


def make_params(key, C):
    ks = jax.random.split(key, 5)
    bound = (6.0 / (C + C)) ** 0.5  # xavier-uniform-like, deterministic
    return {
        "gn_gamma": jnp.ones((C,), jnp.float32),   # PyTorch GroupNorm default
        "gn_beta": jnp.zeros((C,), jnp.float32),
        "wq": jax.random.uniform(ks[0], (C, C, 1, 1), jnp.float32, -bound, bound),
        "wk": jax.random.uniform(ks[1], (C, C, 1, 1), jnp.float32, -bound, bound),
        "wv": jax.random.uniform(ks[2], (C, C, 1, 1), jnp.float32, -bound, bound),
        "wo": jax.random.uniform(ks[3], (C, C, 1, 1), jnp.float32, -bound, bound),
        "bq": jnp.zeros((C,), jnp.float32),
        "bk": jnp.zeros((C,), jnp.float32),
        "bv": jnp.zeros((C,), jnp.float32),
        "bo": jax.random.normal(ks[4], (C,), jnp.float32) * 0.02,
    }


if __name__ == "__main__":
    key = jax.random.PRNGKey(0)
    kx, kp = jax.random.split(key)
    B, C, H, W = 2, 64, 8, 8          # GroupNorm(32, C) requires C % 32 == 0
    x = jax.random.normal(kx, (B, C, H, W), jnp.float32)
    params = make_params(kp, C)

    ref = jax.block_until_ready(attn_block_ref(x, params))

    # 1) resident-KV single-pass path, exact f32 math
    out_f32 = jax.block_until_ready(
        attn_block_pallas(x, params, compute_dtype=jnp.float32))
    assert out_f32.shape == (B, C, H, W)
    err_f32 = float(jnp.max(jnp.abs(out_f32 - ref)))
    assert err_f32 < 5e-4, f"f32 resident-KV mismatch vs reference: {err_f32}"

    # 2) flash (online-softmax) path, exact f32 math, forced multi-tile KV
    out_flash = jax.block_until_ready(
        attn_block_pallas(x, params, compute_dtype=jnp.float32,
                          q_tile=32, kv_tile=32, kv_resident=False))
    err_flash = float(jnp.max(jnp.abs(out_flash - ref)))
    assert err_flash < 5e-4, f"f32 flash mismatch vs reference: {err_flash}"

    # 3) performance path (bf16 MXU operands, f32 accumulation)
    out_bf16 = jax.block_until_ready(attn_block_pallas(x, params))
    assert out_bf16.shape == (B, C, H, W)
    rel_bf16 = float(jnp.max(jnp.abs(out_bf16 - ref)) /
                     (jnp.max(jnp.abs(ref)) + 1e-6))
    assert rel_bf16 < 5e-2, f"bf16 path mismatch vs reference: rel={rel_bf16}"

    print("KERNEL_OK")
</pallas_src>

<mosaic_0001>
module attributes {stable_mosaic.version = 11 : i64} {
  func.func @_probe_single_buffer_kernel(%arg0: i32, %arg1: memref<8x128xf32, #tpu.memory_space<vmem>>, %arg2: memref<8x128xf32, #tpu.memory_space<vmem>>) attributes {dimension_semantics = [#tpu.dimension_semantics<arbitrary>], iteration_bounds = array<i64: 2>, scalar_prefetch = 0 : i64, scratch_operands = 0 : i64, tpu.core_type = #tpu.core_type<tc>, window_params = [{pipeline_mode = #tpu.pipeline_mode<synchronous>, transform_indices = @transform_0, window_bounds = array<i64: 8, 128>}, {transform_indices = @transform_1, window_bounds = array<i64: 8, 128>}]} {
    %c0 = arith.constant 0 : index
    %c0_0 = arith.constant 0 : index
    %0 = vector.load %arg1[%c0, %c0_0] : memref<8x128xf32, #tpu.memory_space<vmem>>, vector<8x128xf32>
    %cst = arith.constant 1.000000e+00 : f32
    %1 = vector.broadcast %cst : f32 to vector<8x128xf32>
    %2 = arith.addf %0, %1 : vector<8x128xf32>
    %c0_1 = arith.constant 0 : index
    %c0_2 = arith.constant 0 : index
    %3 = vector.load %arg2[%c0_1, %c0_2] : memref<8x128xf32, #tpu.memory_space<vmem>>, vector<8x128xf32>
    tpu.vector_store %arg2[%c0_1, %c0_2], %2 {strides = array<i32>} : memref<8x128xf32, #tpu.memory_space<vmem>>, vector<8x128xf32>,
    return
  }
  func.func @transform_0(%arg0: i32) -> (i32, i32) {
    %c0_i32 = arith.constant 0 : i32
    %c0_i32_0 = arith.constant 0 : i32
    %c0_i32_1 = arith.constant 0 : i32
    return %c0_i32, %c0_i32_0 : i32, i32
  }
  func.func @transform_1(%arg0: i32) -> (i32, i32) {
    %c0_i32 = arith.constant 0 : i32
    %c0_i32_0 = arith.constant 0 : i32
    return %arg0, %c0_i32 : i32, i32
  }
}

module attributes {stable_mosaic.version = 11 : i64} {
  func.func @_gn_qkv_proj_kernel(%arg0: i32, %arg1: i32, %arg2: memref<1x64x64xf32, #tpu.memory_space<vmem>>, %arg3: memref<1x1x64xf32, #tpu.memory_space<vmem>>, %arg4: memref<1x1x64xf32, #tpu.memory_space<vmem>>, %arg5: memref<64x64xf32, #tpu.memory_space<vmem>>, %arg6: memref<64x64xf32, #tpu.memory_space<vmem>>, %arg7: memref<64x64xf32, #tpu.memory_space<vmem>>, %arg8: memref<1x64xf32, #tpu.memory_space<vmem>>, %arg9: memref<1x64xf32, #tpu.memory_space<vmem>>, %arg10: memref<1x64xf32, #tpu.memory_space<vmem>>, %arg11: memref<1x64x64xf32, #tpu.memory_space<vmem>>, %arg12: memref<1x64x64xf32, #tpu.memory_space<vmem>>, %arg13: memref<1x64x64xf32, #tpu.memory_space<vmem>>) attributes {dimension_semantics = [#tpu.dimension_semantics<parallel>, #tpu.dimension_semantics<parallel>], iteration_bounds = array<i64: 2, 1>, scalar_prefetch = 0 : i64, scratch_operands = 0 : i64, tpu.core_type = #tpu.core_type<tc>, window_params = [{transform_indices = @transform_0, window_bounds = array<i64: 1, 64, 64>}, {transform_indices = @transform_1, window_bounds = array<i64: 1, 1, 64>}, {transform_indices = @transform_2, window_bounds = array<i64: 1, 1, 64>}, {pipeline_mode = #tpu.pipeline_mode<synchronous>, transform_indices = @transform_3, window_bounds = array<i64: 64, 64>}, {pipeline_mode = #tpu.pipeline_mode<synchronous>, transform_indices = @transform_4, window_bounds = array<i64: 64, 64>}, {pipeline_mode = #tpu.pipeline_mode<synchronous>, transform_indices = @transform_5, window_bounds = array<i64: 64, 64>}, {pipeline_mode = #tpu.pipeline_mode<synchronous>, transform_indices = @transform_6, window_bounds = array<i64: 1, 64>}, {pipeline_mode = #tpu.pipeline_mode<synchronous>, transform_indices = @transform_7, window_bounds = array<i64: 1, 64>}, {pipeline_mode = #tpu.pipeline_mode<synchronous>, transform_indices = @transform_8, window_bounds = array<i64: 1, 64>}, {transform_indices = @transform_9, window_bounds = array<i64: 1, 64, 64>}, {transform_indices = @transform_10, window_bounds = array<i64: 1, 64, 64>}, {transform_indices = @transform_11, window_bounds = array<i64: 1, 64, 64>}]} {
    %c0 = arith.constant 0 : index
    %c0_0 = arith.constant 0 : index
    %c0_1 = arith.constant 0 : index
    %0 = vector.load %arg2[%c0, %c0_0, %c0_1] : memref<1x64x64xf32, #tpu.memory_space<vmem>>, vector<1x64x64xf32>
    %1 = vector.shape_cast %0 : vector<1x64x64xf32> to vector<64x64xf32>
    %c0_2 = arith.constant 0 : index
    %c0_3 = arith.constant 0 : index
    %c0_4 = arith.constant 0 : index
    %2 = vector.load %arg3[%c0_2, %c0_3, %c0_4] : memref<1x1x64xf32, #tpu.memory_space<vmem>>, vector<1x1x64xf32>
    %3 = vector.shape_cast %2 : vector<1x1x64xf32> to vector<1x64xf32>
    %4 = vector.broadcast %3 : vector<1x64xf32> to vector<64x64xf32>
    %5 = arith.mulf %1, %4 : vector<64x64xf32>
    %c0_5 = arith.constant 0 : index
    %c0_6 = arith.constant 0 : index
    %c0_7 = arith.constant 0 : index
    %6 = vector.load %arg4[%c0_5, %c0_6, %c0_7] : memref<1x1x64xf32, #tpu.memory_space<vmem>>, vector<1x1x64xf32>
    %7 = vector.shape_cast %6 : vector<1x1x64xf32> to vector<1x64xf32>
    %8 = vector.broadcast %7 : vector<1x64xf32> to vector<64x64xf32>
    %9 = arith.addf %5, %8 : vector<64x64xf32>
    %c0_8 = arith.constant 0 : index
    %c0_9 = arith.constant 0 : index
    %10 = vector.load %arg5[%c0_8, %c0_9] : memref<64x64xf32, #tpu.memory_space<vmem>>, vector<64x64xf32>
    %cst = arith.constant dense<0.000000e+00> : vector<64x64xf32>
    %11 = tpu.matmul %9, %10, %cst {dimension_numbers = #tpu.dot_dimension_numbers<[1], [0], [0], [1], [0, 0, 1, 1], [], []>} : vector<64x64xf32>, vector<64x64xf32>, vector<64x64xf32> -> vector<64x64xf32>
    %c0_10 = arith.constant 0 : index
    %c0_11 = arith.constant 0 : index
    %12 = vector.load %arg8[%c0_10, %c0_11] : memref<1x64xf32, #tpu.memory_space<vmem>>, vector<1x64xf32>
    %13 = vector.broadcast %12 : vector<1x64xf32> to vector<64x64xf32>
    %14 = arith.addf %11, %13 : vector<64x64xf32>
    %c0_12 = arith.constant 0 : index
    %c0_13 = arith.constant 0 : index
    %c0_14 = arith.constant 0 : index
    %15 = vector.load %arg11[%c0_12, %c0_13, %c0_14] : memref<1x64x64xf32, #tpu.memory_space<vmem>>, vector<1x64x64xf32>
    %16 = vector.shape_cast %15 : vector<1x64x64xf32> to vector<64x64xf32>
    %17 = vector.shape_cast %14 : vector<64x64xf32> to vector<1x64x64xf32>
    tpu.vector_store %arg11[%c0_12, %c0_13, %c0_14], %17 {strides = array<i32>} : memref<1x64x64xf32, #tpu.memory_space<vmem>>, vector<1x64x64xf32>,
    %c0_15 = arith.constant 0 : index
    %c0_16 = arith.constant 0 : index
    %18 = vector.load %arg6[%c0_15, %c0_16] : memref<64x64xf32, #tpu.memory_space<vmem>>, vector<64x64xf32>
    %cst_17 = arith.constant dense<0.000000e+00> : vector<64x64xf32>
    %19 = tpu.matmul %9, %18, %cst_17 {dimension_numbers = #tpu.dot_dimension_numbers<[1], [0], [0], [1], [0, 0, 1, 1], [], []>} : vector<64x64xf32>, vector<64x64xf32>, vector<64x64xf32> -> vector<64x64xf32>
    %c0_18 = arith.constant 0 : index
    %c0_19 = arith.constant 0 : index
    %20 = vector.load %arg9[%c0_18, %c0_19] : memref<1x64xf32, #tpu.memory_space<vmem>>, vector<1x64xf32>
    %21 = vector.broadcast %20 : vector<1x64xf32> to vector<64x64xf32>
    %22 = arith.addf %19, %21 : vector<64x64xf32>
    %c0_20 = arith.constant 0 : index
    %c0_21 = arith.constant 0 : index
    %c0_22 = arith.constant 0 : index
    %23 = vector.load %arg12[%c0_20, %c0_21, %c0_22] : memref<1x64x64xf32, #tpu.memory_space<vmem>>, vector<1x64x64xf32>
    %24 = vector.shape_cast %23 : vector<1x64x64xf32> to vector<64x64xf32>
    %25 = vector.shape_cast %22 : vector<64x64xf32> to vector<1x64x64xf32>
    tpu.vector_store %arg12[%c0_20, %c0_21, %c0_22], %25 {strides = array<i32>} : memref<1x64x64xf32, #tpu.memory_space<vmem>>, vector<1x64x64xf32>,
    %c0_23 = arith.constant 0 : index
    %c0_24 = arith.constant 0 : index
    %26 = vector.load %arg7[%c0_23, %c0_24] : memref<64x64xf32, #tpu.memory_space<vmem>>, vector<64x64xf32>
    %cst_25 = arith.constant dense<0.000000e+00> : vector<64x64xf32>
    %27 = tpu.matmul %9, %26, %cst_25 {dimension_numbers = #tpu.dot_dimension_numbers<[1], [0], [0], [1], [0, 0, 1, 1], [], []>} : vector<64x64xf32>, vector<64x64xf32>, vector<64x64xf32> -> vector<64x64xf32>
    %c0_26 = arith.constant 0 : index
    %c0_27 = arith.constant 0 : index
    %28 = vector.load %arg10[%c0_26, %c0_27] : memref<1x64xf32, #tpu.memory_space<vmem>>, vector<1x64xf32>
    %29 = vector.broadcast %28 : vector<1x64xf32> to vector<64x64xf32>
    %30 = arith.addf %27, %29 : vector<64x64xf32>
    %c0_28 = arith.constant 0 : index
    %c0_29 = arith.constant 0 : index
    %c0_30 = arith.constant 0 : index
    %31 = vector.load %arg13[%c0_28, %c0_29, %c0_30] : memref<1x64x64xf32, #tpu.memory_space<vmem>>, vector<1x64x64xf32>
    %32 = vector.shape_cast %31 : vector<1x64x64xf32> to vector<64x64xf32>
    %33 = vector.shape_cast %30 : vector<64x64xf32> to vector<1x64x64xf32>
    tpu.vector_store %arg13[%c0_28, %c0_29, %c0_30], %33 {strides = array<i32>} : memref<1x64x64xf32, #tpu.memory_space<vmem>>, vector<1x64x64xf32>,
    return
  }
  func.func @transform_0(%arg0: i32, %arg1: i32) -> (i32, i32, i32) {
    %c0_i32 = arith.constant 0 : i32
    %c0_i32_0 = arith.constant 0 : i32
    return %arg0, %arg1, %c0_i32 : i32, i32, i32
  }
  func.func @transform_1(%arg0: i32, %arg1: i32) -> (i32, i32, i32) {
    %c0_i32 = arith.constant 0 : i32
    %c0_i32_0 = arith.constant 0 : i32
    %c0_i32_1 = arith.constant 0 : i32
    return %arg0, %c0_i32, %c0_i32_0 : i32, i32, i32
  }
  func.func @transform_2(%arg0: i32, %arg1: i32) -> (i32, i32, i32) {
    %c0_i32 = arith.constant 0 : i32
    %c0_i32_0 = arith.constant 0 : i32
    %c0_i32_1 = arith.constant 0 : i32
    return %arg0, %c0_i32, %c0_i32_0 : i32, i32, i32
  }
  func.func @transform_3(%arg0: i32, %arg1: i32) -> (i32, i32) {
    %c0_i32 = arith.constant 0 : i32
    %c0_i32_0 = arith.constant 0 : i32
    %c0_i32_1 = arith.constant 0 : i32
    return %c0_i32, %c0_i32_0 : i32, i32
  }
  func.func @transform_4(%arg0: i32, %arg1: i32) -> (i32, i32) {
    %c0_i32 = arith.constant 0 : i32
    %c0_i32_0 = arith.constant 0 : i32
    %c0_i32_1 = arith.constant 0 : i32
    return %c0_i32, %c0_i32_0 : i32, i32
  }
  func.func @transform_5(%arg0: i32, %arg1: i32) -> (i32, i32) {
    %c0_i32 = arith.constant 0 : i32
    %c0_i32_0 = arith.constant 0 : i32
    %c0_i32_1 = arith.constant 0 : i32
    return %c0_i32, %c0_i32_0 : i32, i32
  }
  func.func @transform_6(%arg0: i32, %arg1: i32) -> (i32, i32) {
    %c0_i32 = arith.constant 0 : i32
    %c0_i32_0 = arith.constant 0 : i32
    %c0_i32_1 = arith.constant 0 : i32
    return %c0_i32, %c0_i32_0 : i32, i32
  }
  func.func @transform_7(%arg0: i32, %arg1: i32) -> (i32, i32) {
    %c0_i32 = arith.constant 0 : i32
    %c0_i32_0 = arith.constant 0 : i32
    %c0_i32_1 = arith.constant 0 : i32
    return %c0_i32, %c0_i32_0 : i32, i32
  }
  func.func @transform_8(%arg0: i32, %arg1: i32) -> (i32, i32) {
    %c0_i32 = arith.constant 0 : i32
    %c0_i32_0 = arith.constant 0 : i32
    %c0_i32_1 = arith.constant 0 : i32
    return %c0_i32, %c0_i32_0 : i32, i32
  }
  func.func @transform_9(%arg0: i32, %arg1: i32) -> (i32, i32, i32) {
    %c0_i32 = arith.constant 0 : i32
    %c0_i32_0 = arith.constant 0 : i32
    return %arg0, %arg1, %c0_i32 : i32, i32, i32
  }
  func.func @transform_10(%arg0: i32, %arg1: i32) -> (i32, i32, i32) {
    %c0_i32 = arith.constant 0 : i32
    %c0_i32_0 = arith.constant 0 : i32
    return %arg0, %arg1, %c0_i32 : i32, i32, i32
  }
  func.func @transform_11(%arg0: i32, %arg1: i32) -> (i32, i32, i32) {
    %c0_i32 = arith.constant 0 : i32
    %c0_i32_0 = arith.constant 0 : i32
    return %arg0, %arg1, %c0_i32 : i32, i32, i32
  }
}

</mosaic_0001>

<llo_original>
// kernel: tpu_custom_call.1
$region0: #{tpu_custom_call.1}
  #allocation0 [shape = 'u32[]', space=smem, size = 0x4, offset = 0x4, fixed_abs, tag = 'smem constant byte address 0x4 - core index']
  #allocation1 [shape = 'u32[72,128]{1,0:T(1,128)}', space=vmem, size = 0x9000, scoped, tag = 'internal scratch']
  %s0 = inlined_call_operand.hbm [shape: f32[8,128], index: 0, kind: input, shape index: {}]
  %s1 = inlined_call_operand.hbm [shape: f32[16,128], index: 1, kind: output, shape index: {}]
  %s2 = sld [smem:[#allocation0]]
  $region41: #{tpu_custom_call.1} parent=0
    _
  %s4 = ssub.s32 1, %s2
  %s5 = scalar_select 0, %s4, %s2
  $region1: #{tpu_custom_call.1} parent=0
    #allocation2 [shape = 'u8[4096]{0}', space=vmem, size = 0x1000, scoped, tag = 'input window, operand 0, single buffered']
    #allocation3 [shape = 's32[2]{0}', space=sflag, size = 0x8, scoped, tag = 'scoped memory for tpu_custom_call.1']
    #allocation4 [shape = 's32[2]{0}', space=sflag, size = 0x8, scoped, tag = 'scoped memory for tpu_custom_call.1']
    #allocation5 [shape = 'u8[8192]{0}', space=vmem, size = 0x2000, scoped, tag = 'output window, operand 0']
    %6 = vsyncpa [#allocation3], 0
    %7 = vsyncpa [#allocation4], 0
    %s8 = scalar_lea.sflag [#allocation4], 1
    %9 = vsyncpa %s8, 0
    loop: start=0, step=1, limit=4
    $region2: #{tpu_custom_call.1} parent=1 // loop_pre_header
      _
    $region3: #{tpu_custom_call.1} parent=1 // loop_header
      %s11 = sphi 0, %s15
      %p12 = scmp.ge.s32.totalorder %s11, 4
      %s19 = sphi 0, %s19
      %s21 = sphi 0, %s19
      %s22 = sphi 0, %s21
      %s36 = sphi 0, %s22
      %s42 = sphi 0, %s44
      %s45 = sphi 0, %s42
      %s46 = sphi 0, %s45
      %s62 = sphi 0, %s46
    $region4: #{tpu_custom_call.1} parent=1 // loop_header_branch
      %14 = sbr.rel (%p12) target = $region8
    $region5: #{tpu_custom_call.1} parent=1 // loop_body
      %s16 = ssub.s32 %s11, 1
      %s17 = ssub.s32 %s11, 2
      %s18 = sadd.s32 %s11, 1
      %s20 = sadd.s32 %s19, 1
      %p23 = scmp.eq.s32.totalorder %s11, 1
      %p24 = scmp.ne.s32.totalorder %s19, %s21
      %p25 = scmp.eq.s32.totalorder %s11, 0
      %p26 = por %p24, %p25
      %p27 = scmp.ne.s32.totalorder %s19, %s21
      %p28 = scmp.eq.s32.totalorder %s16, 1
      %p29 = por %p27, %p28
      %p30 = scmp.ne.s32.totalorder %s21, %s22
      %p31 = scmp.eq.s32.totalorder %s16, 0
      %p32 = por %p30, %p31
      %p33 = scmp.ne.s32.totalorder %s21, %s22
      %p34 = scmp.eq.s32.totalorder %s17, 1
      %p35 = por %p33, %p34
      %p37 = scmp.ne.s32.totalorder %s22, %s36
      %p38 = scmp.eq.s32.totalorder %s17, 0
      %p39 = por %p37, %p38
      %s40 = ssub.s32 %s11, %s18
      %p41 = scmp.eq.s32.totalorder %s40, 0
      %s43 = sadd.s32 %s42, 1
      %s44 = scalar_select %p41, %s42, %s43
      %p47 = pneg %p41
      %p48 = scmp.eq.s32.totalorder %s11, 1
      %p49 = por %p47, %p48
      %p50 = scmp.ne.s32.totalorder %s42, %s45
      %p51 = scmp.eq.s32.totalorder %s11, 0
      %p52 = por %p50, %p51
      %p53 = scmp.ne.s32.totalorder %s42, %s45
      %p54 = scmp.eq.s32.totalorder %s16, 1
      %p55 = por %p53, %p54
      %p56 = scmp.ne.s32.totalorder %s45, %s46
      %p57 = scmp.eq.s32.totalorder %s16, 0
      %p58 = por %p56, %p57
      %p59 = scmp.ne.s32.totalorder %s45, %s46
      %p60 = scmp.eq.s32.totalorder %s17, 1
      %p61 = por %p59, %p60
      %p63 = scmp.ne.s32.totalorder %s46, %s62
      %p64 = scmp.eq.s32.totalorder %s17, 0
      %p65 = por %p63, %p64
      %p66 = scmp.le.s32.totalorder 1, %s11
      %p67 = scmp.lt.s32.totalorder %s11, 3
      %p68 = pnand %p66, %p67
      %p69 = pneg %p68
      // Predicated region
      $region9: #{tpu_custom_call.1} parent=5 // pred_check
        _
      $region10: #{tpu_custom_call.1} parent=5 // pred_check_branch
        %71 = sbr.rel (%p68) target = $region12
      $region11: #{tpu_custom_call.1} parent=5 // pred_region
        %s72 = ssub.s32 %s11, 1
        // Predicated region
        $region13: #{tpu_custom_call.1} parent=11 // pred_check
          %p73 = pneg %p32
        $region14: #{tpu_custom_call.1} parent=11 // pred_check_branch
          %75 = sbr.rel (%p73) target = $region16
        $region15: #{tpu_custom_call.1} parent=11 // pred_region
          %77 = vsyncadd [#allocation3], 0
          %s79 = sshll.u32 %s0, 4
          %s80 = int_to_ptr.hbm [resolvable:$true] %s79
          %s81 = sshll.u32 [#allocation2], 4
          %s82 = int_to_ptr.vmem [resolvable:$true] %s81
          %84 = dma.hbm_to_vmem [thread:$0]  %s80, 128, %s82, [#allocation3]
        $region16: #{tpu_custom_call.1} parent=11 // pred_fallthru
          _
      $region12: #{tpu_custom_call.1} parent=5 // pred_fallthru
        _
      %p85 = scmp.lt.s32.totalorder %s11, 2
      // Predicated region
      $region17: #{tpu_custom_call.1} parent=5 // pred_check
        %p86 = pneg %p85
      $region18: #{tpu_custom_call.1} parent=5 // pred_check_branch
        %88 = sbr.rel (%p86) target = $region20
      $region19: #{tpu_custom_call.1} parent=5 // pred_region
        _
      $region20: #{tpu_custom_call.1} parent=5 // pred_fallthru
        _
      %p89 = scmp.le.s32.totalorder 1, %s11
      %p90 = scmp.lt.s32.totalorder %s11, 3
      %p91 = pnand %p89, %p90
      %p92 = pneg %p91
      // Predicated region
      $region21: #{tpu_custom_call.1} parent=5 // pred_check
        _
      $region22: #{tpu_custom_call.1} parent=5 // pred_check_branch
        %94 = sbr.rel (%p91) target = $region24
      $region23: #{tpu_custom_call.1} parent=5 // pred_region
        %s95 = ssub.s32 %s11, 1
        // Predicated region
        $region25: #{tpu_custom_call.1} parent=23 // pred_check
          %p96 = pneg %p32
        $region26: #{tpu_custom_call.1} parent=23 // pred_check_branch
          %98 = sbr.rel (%p96) target = $region28
        $region27: #{tpu_custom_call.1} parent=23 // pred_region
          %100 = dma.done [#allocation3], 128
        $region28: #{tpu_custom_call.1} parent=23 // pred_fallthru
          _
        %p101 = pneg %p32
        %p102 = pneg %p29
        %p103 = pneg %p58
        %p104 = pneg %p55
        %s105 = sand.u32 %s45, 1
        %s106 = scalar_lea.sflag [#allocation4], %s105
        %s107 = sand.u32 %s45, 1
        %s108 = smul.addr %s107, 8
        %s109 = scalar_lea.vmem [#allocation5], %s108
        %v110 = vld [vmem:[#allocation2] sm:$0xff]
        %v111 = vadd.f32 %v110, 1.0
        %112 = vst [vmem:[%s109] sm:$0xff] %v111
        %s113 = sand.u32 %s45, 1
        %s114 = scalar_lea.sflag [#allocation4], %s113
        %s115 = sand.u32 %s45, 1
        %s116 = smul.addr %s115, 8
        %s117 = scalar_lea.vmem [#allocation5], %s116
        // Predicated region
        $region29: #{tpu_custom_call.1} parent=23 // pred_check
          %p118 = pneg %p55
        $region30: #{tpu_custom_call.1} parent=23 // pred_check_branch
          %120 = sbr.rel (%p118) target = $region32
        $region31: #{tpu_custom_call.1} parent=23 // pred_region
          %122 = vsyncadd %s114, 0
          %s123 = smul.addr %s16, 8
          %s124 = scalar_lea.hbm %s1, %s123
          %s126 = sshll.u32 %s117, 4
          %s127 = int_to_ptr.vmem [resolvable:$true] %s126
          %s128 = sshll.u32 %s124, 4
          %s129 = int_to_ptr.hbm [resolvable:$true] %s128
          %131 = dma.vmem_to_hbm [thread:$0]  %s127, 128, %s129, %s114
        $region32: #{tpu_custom_call.1} parent=23 // pred_fallthru
          _
      $region24: #{tpu_custom_call.1} parent=5 // pred_fallthru
        _
      %p132 = scmp.le.s32.totalorder 2, %s11
      // Predicated region
      $region33: #{tpu_custom_call.1} parent=5 // pred_check
        %p133 = pneg %p132
      $region34: #{tpu_custom_call.1} parent=5 // pred_check_branch
        %135 = sbr.rel (%p133) target = $region36
      $region35: #{tpu_custom_call.1} parent=5 // pred_region
        %s136 = ssub.s32 %s11, 2
        // Predicated region
        $region37: #{tpu_custom_call.1} parent=35 // pred_check
          %p137 = pneg %p61
        $region38: #{tpu_custom_call.1} parent=35 // pred_check_branch
          %139 = sbr.rel (%p137) target = $region40
        $region39: #{tpu_custom_call.1} parent=35 // pred_region
          %s140 = sand.u32 %s46, 1
          %s141 = scalar_lea.sflag [#allocation4], %s140
          %s142 = sand.u32 %s46, 1
          %s143 = smul.addr %s142, 8
          %s144 = scalar_lea.vmem [#allocation5], %s143
          %146 = dma.done %s141, 128
        $region40: #{tpu_custom_call.1} parent=35 // pred_fallthru
          _
      $region36: #{tpu_custom_call.1} parent=5 // pred_fallthru
        _
    $region6: #{tpu_custom_call.1} parent=1 // loop_footer
      %s15 = sadd.s32 1, %s11
    $region7: #{tpu_custom_call.1} parent=1 // loop_footer_branch
      %10 = sbr.rel target = $region3
    $region8: #{tpu_custom_call.1} parent=1 // loop_exit
      _
    %147 = vsyncpa [#allocation3], 1
    %s148 = scalar_lea.sflag [#allocation3], 1
    %149 = vsyncpa %s148, 1
    %150 = vsyncpa [#allocation4], 1
    %s151 = scalar_lea.sflag [#allocation4], 1
    %152 = vsyncpa %s151, 1

// kernel: tpu_custom_call.1
$region0: #{tpu_custom_call.1}
  #allocation0 [shape = 'u32[]', space=smem, size = 0x4, offset = 0x4, fixed_abs, tag = 'smem constant byte address 0x4 - core index']
  #allocation1 [shape = 'u32[72,128]{1,0:T(1,128)}', space=vmem, size = 0x9000, scoped, tag = 'internal scratch']
  %s0 = inlined_call_operand.hbm [shape: f32[2,64,64], index: 0, kind: input, shape index: {}]
  %s1 = inlined_call_operand.hbm [shape: f32[2,1,64], index: 1, kind: input, shape index: {}]
  %s2 = inlined_call_operand.hbm [shape: f32[2,1,64], index: 2, kind: input, shape index: {}]
  %s3 = inlined_call_operand.hbm [shape: f32[64,64], index: 3, kind: input, shape index: {}]
  %s4 = inlined_call_operand.hbm [shape: f32[64,64], index: 4, kind: input, shape index: {}]
  %s5 = inlined_call_operand.hbm [shape: f32[64,64], index: 5, kind: input, shape index: {}]
  %s6 = inlined_call_operand.vmem [shape: f32[1,64], index: 6, kind: input, shape index: {}]
  %s7 = inlined_call_operand.vmem [shape: f32[1,64], index: 7, kind: input, shape index: {}]
  %s8 = inlined_call_operand.vmem [shape: f32[1,64], index: 8, kind: input, shape index: {}]
  %s9 = inlined_call_operand.hbm [shape: f32[2,64,64], index: 9, kind: output, shape index: {0}]
  %s10 = inlined_call_operand.hbm [shape: f32[2,64,64], index: 10, kind: output, shape index: {1}]
  %s11 = inlined_call_operand.hbm [shape: f32[2,64,64], index: 11, kind: output, shape index: {2}]
  %12 = xla_tuple %s9, %s10, %s11
  %s13 = sld [smem:[#allocation0]]
  $region109: #{tpu_custom_call.1} parent=0
    _
  %s15 = ssub.s32 1, %s13
  %s16 = scalar_select 0, %s15, %s13
  $region1: #{tpu_custom_call.1} parent=0
    #allocation2 [shape = 'u8[65536]{0}', space=vmem, size = 0x10000, scoped, tag = 'input window, operand 0']
    #allocation3 [shape = 's32[2]{0}', space=sflag, size = 0x8, scoped, tag = 'scoped memory for tpu_custom_call.1']
    #allocation4 [shape = 's32[2]{0}', space=sflag, size = 0x8, scoped, tag = 'scoped memory for tpu_custom_call.1']
    #allocation5 [shape = 'u8[1024]{0}', space=vmem, size = 0x400, scoped, tag = 'input window, operand 1']
    #allocation6 [shape = 's32[2]{0}', space=sflag, size = 0x8, scoped, tag = 'scoped memory for tpu_custom_call.1']
    #allocation7 [shape = 'u8[1024]{0}', space=vmem, size = 0x400, scoped, tag = 'input window, operand 2']
    #allocation8 [shape = 'u8[32768]{0}', space=vmem, size = 0x8000, scoped, tag = 'input window, operand 3, single buffered']
    #allocation9 [shape = 's32[1]{0}', space=sflag, size = 0x4, scoped, tag = 'scoped memory for tpu_custom_call.1']
    #allocation10 [shape = 'u8[32768]{0}', space=vmem, size = 0x8000, scoped, tag = 'input window, operand 4, single buffered']
    #allocation11 [shape = 'u8[32768]{0}', space=vmem, size = 0x8000, scoped, tag = 'input window, operand 5, single buffered']
    #allocation12 [shape = 's32[1]{0}', space=sflag, size = 0x4, scoped, tag = 'scoped memory for tpu_custom_call.1']
    #allocation13 [shape = 'u8[65536]{0}', space=vmem, size = 0x10000, scoped, tag = 'output window, operand 0']
    #allocation14 [shape = 'u8[65536]{0}', space=vmem, size = 0x10000, scoped, tag = 'output window, operand 1']
    #allocation15 [shape = 's32[2]{0}', space=sflag, size = 0x8, scoped, tag = 'scoped memory for tpu_custom_call.1']
    #allocation16 [shape = 'u8[65536]{0}', space=vmem, size = 0x10000, scoped, tag = 'output window, operand 2']
    %17 = vsyncpa [#allocation3], 0
    %s18 = scalar_lea.sflag [#allocation3], 1
    %19 = vsyncpa %s18, 0
    %20 = vsyncpa [#allocation6], 0
    %s21 = scalar_lea.sflag [#allocation6], 1
    %22 = vsyncpa %s21, 0
    %23 = vsyncpa [#allocation9], 0
    %24 = vsyncpa [#allocation12], 0
    %25 = vsyncpa [#allocation4], 0
    %s26 = scalar_lea.sflag [#allocation4], 1
    %27 = vsyncpa %s26, 0
    %28 = vsyncpa [#allocation15], 0
    %s29 = scalar_lea.sflag [#allocation15], 1
    %30 = vsyncpa %s29, 0
    loop: start=0, step=1, limit=4
    $region2: #{tpu_custom_call.1} parent=1 // loop_pre_header
      _
    $region3: #{tpu_custom_call.1} parent=1 // loop_header
      %s32 = sphi 0, %s36
      %p33 = scmp.ge.s32.totalorder %s32, 4
      %s39 = sphi 0, %s51
      %s40 = sphi 0, %s47
      %s41 = sphi 0, %s39
      %s42 = sphi 0, %s40
      %s43 = sphi 0, %s41
      %s44 = sphi 0, %s42
      %s56 = sphi 0, %s58
      %s59 = sphi 0, %s56
      %s60 = sphi 0, %s59
      %s76 = sphi 0, %s60
      %s82 = sphi 0, %s84
      %s85 = sphi 0, %s82
      %s86 = sphi 0, %s85
      %s102 = sphi 0, %s86
      %s108 = sphi 0, %s110
      %s111 = sphi 0, %s108
      %s112 = sphi 0, %s111
      %s128 = sphi 0, %s112
      %s132 = sphi 0, %s132
      %s134 = sphi 0, %s132
      %s135 = sphi 0, %s134
      %s149 = sphi 0, %s135
      %s153 = sphi 0, %s153
      %s155 = sphi 0, %s153
      %s156 = sphi 0, %s155
      %s170 = sphi 0, %s156
      %s174 = sphi 0, %s174
      %s176 = sphi 0, %s174
      %s177 = sphi 0, %s176
      %s191 = sphi 0, %s177
      %s195 = sphi 0, %s195
      %s197 = sphi 0, %s195
      %s198 = sphi 0, %s197
      %s212 = sphi 0, %s198
      %s216 = sphi 0, %s216
      %s218 = sphi 0, %s216
      %s219 = sphi 0, %s218
      %s233 = sphi 0, %s219
      %s237 = sphi 0, %s237
      %s239 = sphi 0, %s237
      %s240 = sphi 0, %s239
      %s254 = sphi 0, %s240
      %s262 = sphi 0, %s264
      %s265 = sphi 0, %s262
      %s266 = sphi 0, %s265
      %s282 = sphi 0, %s266
      %s290 = sphi 0, %s292
      %s293 = sphi 0, %s290
      %s294 = sphi 0, %s293
      %s310 = sphi 0, %s294
      %s318 = sphi 0, %s320
      %s321 = sphi 0, %s318
      %s322 = sphi 0, %s321
      %s338 = sphi 0, %s322
    $region4: #{tpu_custom_call.1} parent=1 // loop_header_branch
      %35 = sbr.rel (%p33) target = $region8
    $region5: #{tpu_custom_call.1} parent=1 // loop_body
      %s37 = ssub.s32 %s32, 1
      %s38 = ssub.s32 %s32, 2
      %s45 = sadd.s32 1, %s40
      %p46 = scmp.ge.s32.totalorder %s45, 1
      %s47 = scalar_select %p46, 0, %s45
      %s48 = sadd.s32 1, %s39
      %s49 = scalar_select %p46, %s48, %s39
      %p50 = scmp.ge.s32.totalorder %s49, 2
      %s51 = scalar_select %p50, 0, %s49
      %s52 = ssub.s32 %s39, %s51
      %s53 = ssub.s32 %s40, %s47
      %s54 = sor.u32 %s52, %s53
      %p55 = scmp.eq.s32.totalorder %s54, 0
      %s57 = sadd.s32 %s56, 1
      %s58 = scalar_select %p55, %s56, %s57
      %p61 = pneg %p55
      %p62 = scmp.eq.s32.totalorder %s32, 1
      %p63 = por %p61, %p62
      %p64 = scmp.ne.s32.totalorder %s56, %s59
      %p65 = scmp.eq.s32.totalorder %s32, 0
      %p66 = por %p64, %p65
      %p67 = scmp.ne.s32.totalorder %s56, %s59
      %p68 = scmp.eq.s32.totalorder %s37, 1
      %p69 = por %p67, %p68
      %p70 = scmp.ne.s32.totalorder %s59, %s60
      %p71 = scmp.eq.s32.totalorder %s37, 0
      %p72 = por %p70, %p71
      %p73 = scmp.ne.s32.totalorder %s59, %s60
      %p74 = scmp.eq.s32.totalorder %s38, 1
      %p75 = por %p73, %p74
      %p77 = scmp.ne.s32.totalorder %s60, %s76
      %p78 = scmp.eq.s32.totalorder %s38, 0
      %p79 = por %p77, %p78
      %s80 = ssub.s32 %s39, %s51
      %p81 = scmp.eq.s32.totalorder %s80, 0
      %s83 = sadd.s32 %s82, 1
      %s84 = scalar_select %p81, %s82, %s83
      %p87 = pneg %p81
      %p88 = scmp.eq.s32.totalorder %s32, 1
      %p89 = por %p87, %p88
      %p90 = scmp.ne.s32.totalorder %s82, %s85
      %p91 = scmp.eq.s32.totalorder %s32, 0
      %p92 = por %p90, %p91
      %p93 = scmp.ne.s32.totalorder %s82, %s85
      %p94 = scmp.eq.s32.totalorder %s37, 1
      %p95 = por %p93, %p94
      %p96 = scmp.ne.s32.totalorder %s85, %s86
      %p97 = scmp.eq.s32.totalorder %s37, 0
      %p98 = por %p96, %p97
      %p99 = scmp.ne.s32.totalorder %s85, %s86
      %p100 = scmp.eq.s32.totalorder %s38, 1
      %p101 = por %p99, %p100
      %p103 = scmp.ne.s32.totalorder %s86, %s102
      %p104 = scmp.eq.s32.totalorder %s38, 0
      %p105 = por %p103, %p104
      %s106 = ssub.s32 %s39, %s51
      %p107 = scmp.eq.s32.totalorder %s106, 0
      %s109 = sadd.s32 %s108, 1
      %s110 = scalar_select %p107, %s108, %s109
      %p113 = pneg %p107
      %p114 = scmp.eq.s32.totalorder %s32, 1
      %p115 = por %p113, %p114
      %p116 = scmp.ne.s32.totalorder %s108, %s111
      %p117 = scmp.eq.s32.totalorder %s32, 0
      %p118 = por %p116, %p117
      %p119 = scmp.ne.s32.totalorder %s108, %s111
      %p120 = scmp.eq.s32.totalorder %s37, 1
      %p121 = por %p119, %p120
      %p122 = scmp.ne.s32.totalorder %s111, %s112
      %p123 = scmp.eq.s32.totalorder %s37, 0
      %p124 = por %p122, %p123
      %p125 = scmp.ne.s32.totalorder %s111, %s112
      %p126 = scmp.eq.s32.totalorder %s38, 1
      %p127 = por %p125, %p126
      %p129 = scmp.ne.s32.totalorder %s112, %s128
      %p130 = scmp.eq.s32.totalorder %s38, 0
      %p131 = por %p129, %p130
      %s133 = sadd.s32 %s132, 1
      %p136 = scmp.eq.s32.totalorder %s32, 1
      %p137 = scmp.ne.s32.totalorder %s132, %s134
      %p138 = scmp.eq.s32.totalorder %s32, 0
      %p139 = por %p137, %p138
      %p140 = scmp.ne.s32.totalorder %s132, %s134
      %p141 = scmp.eq.s32.totalorder %s37, 1
      %p142 = por %p140, %p141
      %p143 = scmp.ne.s32.totalorder %s134, %s135
      %p144 = scmp.eq.s32.totalorder %s37, 0
      %p145 = por %p143, %p144
      %p146 = scmp.ne.s32.totalorder %s134, %s135
      %p147 = scmp.eq.s32.totalorder %s38, 1
      %p148 = por %p146, %p147
      %p150 = scmp.ne.s32.totalorder %s135, %s149
      %p151 = scmp.eq.s32.totalorder %s38, 0
      %p152 = por %p150, %p151
      %s154 = sadd.s32 %s153, 1
      %p157 = scmp.eq.s32.totalorder %s32, 1
      %p158 = scmp.ne.s32.totalorder %s153, %s155
      %p159 = scmp.eq.s32.totalorder %s32, 0
      %p160 = por %p158, %p159
      %p161 = scmp.ne.s32.totalorder %s153, %s155
      %p162 = scmp.eq.s32.totalorder %s37, 1
      %p163 = por %p161, %p162
      %p164 = scmp.ne.s32.totalorder %s155, %s156
      %p165 = scmp.eq.s32.totalorder %s37, 0
      %p166 = por %p164, %p165
      %p167 = scmp.ne.s32.totalorder %s155, %s156
      %p168 = scmp.eq.s32.totalorder %s38, 1
      %p169 = por %p167, %p168
      %p171 = scmp.ne.s32.totalorder %s156, %s170
      %p172 = scmp.eq.s32.totalorder %s38, 0
      %p173 = por %p171, %p172
      %s175 = sadd.s32 %s174, 1
      %p178 = scmp.eq.s32.totalorder %s32, 1
      %p179 = scmp.ne.s32.totalorder %s174, %s176
      %p180 = scmp.eq.s32.totalorder %s32, 0
      %p181 = por %p179, %p180
      %p182 = scmp.ne.s32.totalorder %s174, %s176
      %p183 = scmp.eq.s32.totalorder %s37, 1
      %p184 = por %p182, %p183
      %p185 = scmp.ne.s32.totalorder %s176, %s177
      %p186 = scmp.eq.s32.totalorder %s37, 0
      %p187 = por %p185, %p186
      %p188 = scmp.ne.s32.totalorder %s176, %s177
      %p189 = scmp.eq.s32.totalorder %s38, 1
      %p190 = por %p188, %p189
      %p192 = scmp.ne.s32.totalorder %s177, %s191
      %p193 = scmp.eq.s32.totalorder %s38, 0
      %p194 = por %p192, %p193
      %s196 = sadd.s32 %s195, 1
      %p199 = scmp.eq.s32.totalorder %s32, 1
      %p200 = scmp.ne.s32.totalorder %s195, %s197
      %p201 = scmp.eq.s32.totalorder %s32, 0
      %p202 = por %p200, %p201
      %p203 = scmp.ne.s32.totalorder %s195, %s197
      %p204 = scmp.eq.s32.totalorder %s37, 1
      %p205 = por %p203, %p204
      %p206 = scmp.ne.s32.totalorder %s197, %s198
      %p207 = scmp.eq.s32.totalorder %s37, 0
      %p208 = por %p206, %p207
      %p209 = scmp.ne.s32.totalorder %s197, %s198
      %p210 = scmp.eq.s32.totalorder %s38, 1
      %p211 = por %p209, %p210
      %p213 = scmp.ne.s32.totalorder %s198, %s212
      %p214 = scmp.eq.s32.totalorder %s38, 0
      %p215 = por %p213, %p214
      %s217 = sadd.s32 %s216, 1
      %p220 = scmp.eq.s32.totalorder %s32, 1
      %p221 = scmp.ne.s32.totalorder %s216, %s218
      %p222 = scmp.eq.s32.totalorder %s32, 0
      %p223 = por %p221, %p222
      %p224 = scmp.ne.s32.totalorder %s216, %s218
      %p225 = scmp.eq.s32.totalorder %s37, 1
      %p226 = por %p224, %p225
      %p227 = scmp.ne.s32.totalorder %s218, %s219
      %p228 = scmp.eq.s32.totalorder %s37, 0
      %p229 = por %p227, %p228
      %p230 = scmp.ne.s32.totalorder %s218, %s219
      %p231 = scmp.eq.s32.totalorder %s38, 1
      %p232 = por %p230, %p231
      %p234 = scmp.ne.s32.totalorder %s219, %s233
      %p235 = scmp.eq.s32.totalorder %s38, 0
      %p236 = por %p234, %p235
      %s238 = sadd.s32 %s237, 1
      %p241 = scmp.eq.s32.totalorder %s32, 1
      %p242 = scmp.ne.s32.totalorder %s237, %s239
      %p243 = scmp.eq.s32.totalorder %s32, 0
      %p244 = por %p242, %p243
      %p245 = scmp.ne.s32.totalorder %s237, %s239
      %p246 = scmp.eq.s32.totalorder %s37, 1
      %p247 = por %p245, %p246
      %p248 = scmp.ne.s32.totalorder %s239, %s240
      %p249 = scmp.eq.s32.totalorder %s37, 0
      %p250 = por %p248, %p249
      %p251 = scmp.ne.s32.totalorder %s239, %s240
      %p252 = scmp.eq.s32.totalorder %s38, 1
      %p253 = por %p251, %p252
      %p255 = scmp.ne.s32.totalorder %s240, %s254
      %p256 = scmp.eq.s32.totalorder %s38, 0
      %p257 = por %p255, %p256
      %s258 = ssub.s32 %s39, %s51
      %s259 = ssub.s32 %s40, %s47
      %s260 = sor.u32 %s258, %s259
      %p261 = scmp.eq.s32.totalorder %s260, 0
      %s263 = sadd.s32 %s262, 1
      %s264 = scalar_select %p261, %s262, %s263
      %p267 = pneg %p261
      %p268 = scmp.eq.s32.totalorder %s32, 1
      %p269 = por %p267, %p268
      %p270 = scmp.ne.s32.totalorder %s262, %s265
      %p271 = scmp.eq.s32.totalorder %s32, 0
      %p272 = por %p270, %p271
      %p273 = scmp.ne.s32.totalorder %s262, %s265
      %p274 = scmp.eq.s32.totalorder %s37, 1
      %p275 = por %p273, %p274
      %p276 = scmp.ne.s32.totalorder %s265, %s266
      %p277 = scmp.eq.s32.totalorder %s37, 0
      %p278 = por %p276, %p277
      %p279 = scmp.ne.s32.totalorder %s265, %s266
      %p280 = scmp.eq.s32.totalorder %s38, 1
      %p281 = por %p279, %p280
      %p283 = scmp.ne.s32.totalorder %s266, %s282
      %p284 = scmp.eq.s32.totalorder %s38, 0
      %p285 = por %p283, %p284
      %s286 = ssub.s32 %s39, %s51
      %s287 = ssub.s32 %s40, %s47
      %s288 = sor.u32 %s286, %s287
      %p289 = scmp.eq.s32.totalorder %s288, 0
      %s291 = sadd.s32 %s290, 1
      %s292 = scalar_select %p289, %s290, %s291
      %p295 = pneg %p289
      %p296 = scmp.eq.s32.totalorder %s32, 1
      %p297 = por %p295, %p296
      %p298 = scmp.ne.s32.totalorder %s290, %s293
      %p299 = scmp.eq.s32.totalorder %s32, 0
      %p300 = por %p298, %p299
      %p301 = scmp.ne.s32.totalorder %s290, %s293
      %p302 = scmp.eq.s32.totalorder %s37, 1
      %p303 = por %p301, %p302
      %p304 = scmp.ne.s32.totalorder %s293, %s294
      %p305 = scmp.eq.s32.totalorder %s37, 0
      %p306 = por %p304, %p305
      %p307 = scmp.ne.s32.totalorder %s293, %s294
      %p308 = scmp.eq.s32.totalorder %s38, 1
      %p309 = por %p307, %p308
      %p311 = scmp.ne.s32.totalorder %s294, %s310
      %p312 = scmp.eq.s32.totalorder %s38, 0
      %p313 = por %p311, %p312
      %s314 = ssub.s32 %s39, %s51
      %s315 = ssub.s32 %s40, %s47
      %s316 = sor.u32 %s314, %s315
      %p317 = scmp.eq.s32.totalorder %s316, 0
      %s319 = sadd.s32 %s318, 1
      %s320 = scalar_select %p317, %s318, %s319
      %p323 = pneg %p317
      %p324 = scmp.eq.s32.totalorder %s32, 1
      %p325 = por %p323, %p324
      %p326 = scmp.ne.s32.totalorder %s318, %s321
      %p327 = scmp.eq.s32.totalorder %s32, 0
      %p328 = por %p326, %p327
      %p329 = scmp.ne.s32.totalorder %s318, %s321
      %p330 = scmp.eq.s32.totalorder %s37, 1
      %p331 = por %p329, %p330
      %p332 = scmp.ne.s32.totalorder %s321, %s322
      %p333 = scmp.eq.s32.totalorder %s37, 0
      %p334 = por %p332, %p333
      %p335 = scmp.ne.s32.totalorder %s321, %s322
      %p336 = scmp.eq.s32.totalorder %s38, 1
      %p337 = por %p335, %p336
      %p339 = scmp.ne.s32.totalorder %s322, %s338
      %p340 = scmp.eq.s32.totalorder %s38, 0
      %p341 = por %p339, %p340
      %p342 = scmp.le.s32.totalorder 1, %s32
      %p343 = scmp.lt.s32.totalorder %s32, 3
      %p344 = pnand %p342, %p343
      %p345 = pneg %p344
      // Predicated region
      $region9: #{tpu_custom_call.1} parent=5 // pred_check
        _
      $region10: #{tpu_custom_call.1} parent=5 // pred_check_branch
        %347 = sbr.rel (%p344) target = $region12
      $region11: #{tpu_custom_call.1} parent=5 // pred_region
        %s348 = ssub.s32 %s32, 1
        // Predicated region
        $region13: #{tpu_custom_call.1} parent=11 // pred_check
          %p349 = pneg %p145
        $region14: #{tpu_custom_call.1} parent=11 // pred_check_branch
          %351 = sbr.rel (%p349) target = $region16
        $region15: #{tpu_custom_call.1} parent=11 // pred_region
          %353 = vsyncadd [#allocation9], 0
          %s354 = sshll.u32 %s3, 4
          %s355 = int_to_ptr.hbm [resolvable:$true] %s354
          %s356 = sshll.u32 [#allocation8], 4
          %s357 = int_to_ptr.vmem [resolvable:$true] %s356
          %362 = dma.hbm_to_vmem [thread:$0]  %s355, 1024, %s357, [#allocation9], 128, 128, 8
        $region16: #{tpu_custom_call.1} parent=11 // pred_fallthru
          _
        // Predicated region
        $region17: #{tpu_custom_call.1} parent=11 // pred_check
          %p363 = pneg %p166
        $region18: #{tpu_custom_call.1} parent=11 // pred_check_branch
          %365 = sbr.rel (%p363) target = $region20
        $region19: #{tpu_custom_call.1} parent=11 // pred_region
          %367 = vsyncadd [#allocation9], 0
          %s368 = sshll.u32 %s4, 4
          %s369 = int_to_ptr.hbm [resolvable:$true] %s368
          %s370 = sshll.u32 [#allocation10], 4
          %s371 = int_to_ptr.vmem [resolvable:$true] %s370
          %376 = dma.hbm_to_vmem [thread:$0]  %s369, 1024, %s371, [#allocation9], 128, 128, 8
        $region20: #{tpu_custom_call.1} parent=11 // pred_fallthru
          _
        // Predicated region
        $region21: #{tpu_custom_call.1} parent=11 // pred_check
          %p377 = pneg %p187
        $region22: #{tpu_custom_call.1} parent=11 // pred_check_branch
          %379 = sbr.rel (%p377) target = $region24
        $region23: #{tpu_custom_call.1} parent=11 // pred_region
          %381 = vsyncadd [#allocation12], 0
          %s382 = sshll.u32 %s5, 4
          %s383 = int_to_ptr.hbm [resolvable:$true] %s382
          %s384 = sshll.u32 [#allocation11], 4
          %s385 = int_to_ptr.vmem [resolvable:$true] %s384
          %390 = dma.hbm_to_vmem [thread:$0]  %s383, 1024, %s385, [#allocation12], 128, 128, 8
        $region24: #{tpu_custom_call.1} parent=11 // pred_fallthru
          _
        // Predicated region
        $region25: #{tpu_custom_call.1} parent=11 // pred_check
          %p391 = pneg %p208
        $region26: #{tpu_custom_call.1} parent=11 // pred_check_branch
          %393 = sbr.rel (%p391) target = $region28
        $region27: #{tpu_custom_call.1} parent=11 // pred_region
          _
        $region28: #{tpu_custom_call.1} parent=11 // pred_fallthru
          _
        // Predicated region
        $region29: #{tpu_custom_call.1} parent=11 // pred_check
          %p394 = pneg %p229
        $region30: #{tpu_custom_call.1} parent=11 // pred_check_branch
          %396 = sbr.rel (%p394) target = $region32
        $region31: #{tpu_custom_call.1} parent=11 // pred_region
          _
        $region32: #{tpu_custom_call.1} parent=11 // pred_fallthru
          _
        // Predicated region
        $region33: #{tpu_custom_call.1} parent=11 // pred_check
          %p397 = pneg %p250
        $region34: #{tpu_custom_call.1} parent=11 // pred_check_branch
          %399 = sbr.rel (%p397) target = $region36
        $region35: #{tpu_custom_call.1} parent=11 // pred_region
          _
        $region36: #{tpu_custom_call.1} parent=11 // pred_fallthru
          _
      $region12: #{tpu_custom_call.1} parent=5 // pred_fallthru
        _
      %p400 = scmp.lt.s32.totalorder %s32, 2
      // Predicated region
      $region37: #{tpu_custom_call.1} parent=5 // pred_check
        %p401 = pneg %p400
      $region38: #{tpu_custom_call.1} parent=5 // pred_check_branch
        %403 = sbr.rel (%p401) target = $region40
      $region39: #{tpu_custom_call.1} parent=5 // pred_region
        // Predicated region
        $region41: #{tpu_custom_call.1} parent=39 // pred_check
          %p404 = pneg %p66
        $region42: #{tpu_custom_call.1} parent=39 // pred_check_branch
          %406 = sbr.rel (%p404) target = $region44
        $region43: #{tpu_custom_call.1} parent=39 // pred_region
          %s407 = sand.u32 %s56, 1
          %s408 = scalar_lea.sflag [#allocation3], %s407
          %s409 = sand.u32 %s56, 1
          %s410 = smul.addr %s409, 64
          %s411 = scalar_lea.vmem [#allocation2], %s410
          %s412 = smul.u32 8, %s40
          %414 = vsyncadd %s408, 0
          %s415 = smul.addr %s39, 8
          %s416 = sadd.s32 %s412, %s415
          %s417 = smul.addr %s416, 8
          %s418 = scalar_lea.hbm %s0, %s417
          %s419 = sshll.u32 %s418, 4
          %s420 = int_to_ptr.hbm [resolvable:$true] %s419
          %s421 = sshll.u32 %s411, 4
          %s422 = int_to_ptr.vmem [resolvable:$true] %s421
          %427 = dma.hbm_to_vmem [thread:$0]  %s420, 1024, %s422, %s408, 128, 128, 8
        $region44: #{tpu_custom_call.1} parent=39 // pred_fallthru
          _
        // Predicated region
        $region45: #{tpu_custom_call.1} parent=39 // pred_check
          %p428 = pneg %p92
        $region46: #{tpu_custom_call.1} parent=39 // pred_check_branch
          %430 = sbr.rel (%p428) target = $region48
        $region47: #{tpu_custom_call.1} parent=39 // pred_region
          %s431 = sand.u32 %s32, 1
          %s432 = scalar_lea.sflag [#allocation6], %s431
          %s433 = sand.u32 %s82, 1
          %s434 = scalar_lea.vmem [#allocation5], %s433
          %436 = vsyncadd %s432, 0
          %s437 = scalar_lea.hbm %s1, %s39
          %s439 = sshll.u32 %s437, 4
          %s440 = int_to_ptr.hbm [resolvable:$true] %s439
          %s441 = sshll.u32 %s434, 4
          %s442 = int_to_ptr.vmem [resolvable:$true] %s441
          %444 = dma.hbm_to_vmem [thread:$0]  %s440, 16, %s442, %s432
        $region48: #{tpu_custom_call.1} parent=39 // pred_fallthru
          _
        // Predicated region
        $region49: #{tpu_custom_call.1} parent=39 // pred_check
          %p445 = pneg %p118
        $region50: #{tpu_custom_call.1} parent=39 // pred_check_branch
          %447 = sbr.rel (%p445) target = $region52
        $region51: #{tpu_custom_call.1} parent=39 // pred_region
          %s448 = sand.u32 %s32, 1
          %s449 = scalar_lea.sflag [#allocation6], %s448
          %s450 = sand.u32 %s108, 1
          %s451 = scalar_lea.vmem [#allocation7], %s450
          %453 = vsyncadd %s449, 0
          %s454 = scalar_lea.hbm %s2, %s39
          %s456 = sshll.u32 %s454, 4
          %s457 = int_to_ptr.hbm [resolvable:$true] %s456
          %s458 = sshll.u32 %s451, 4
          %s459 = int_to_ptr.vmem [resolvable:$true] %s458
          %461 = dma.hbm_to_vmem [thread:$0]  %s457, 16, %s459, %s449
        $region52: #{tpu_custom_call.1} parent=39 // pred_fallthru
          _
      $region40: #{tpu_custom_call.1} parent=5 // pred_fallthru
        _
      %p462 = scmp.le.s32.totalorder 1, %s32
      %p463 = scmp.lt.s32.totalorder %s32, 3
      %p464 = pnand %p462, %p463
      %p465 = pneg %p464
      // Predicated region
      $region53: #{tpu_custom_call.1} parent=5 // pred_check
        _
      $region54: #{tpu_custom_call.1} parent=5 // pred_check_branch
        %467 = sbr.rel (%p464) target = $region56
      $region55: #{tpu_custom_call.1} parent=5 // pred_region
        %s468 = ssub.s32 %s32, 1
        %s469 = sand.u32 %s59, 1
        %s470 = scalar_lea.sflag [#allocation3], %s469
        %s471 = sand.u32 %s59, 1
        %s472 = smul.addr %s471, 64
        %s473 = scalar_lea.vmem [#allocation2], %s472
        // Predicated region
        $region57: #{tpu_custom_call.1} parent=55 // pred_check
          %p474 = pneg %p72
        $region58: #{tpu_custom_call.1} parent=55 // pred_check_branch
          %476 = sbr.rel (%p474) target = $region60
        $region59: #{tpu_custom_call.1} parent=55 // pred_region
          %478 = dma.done %s470, 1024
        $region60: #{tpu_custom_call.1} parent=55 // pred_fallthru
          _
        %s479 = sand.u32 %s37, 1
        %s480 = scalar_lea.sflag [#allocation6], %s479
        %s481 = sand.u32 %s85, 1
        %s482 = scalar_lea.vmem [#allocation5], %s481
        // Predicated region
        $region61: #{tpu_custom_call.1} parent=55 // pred_check
          %p483 = pneg %p98
        $region62: #{tpu_custom_call.1} parent=55 // pred_check_branch
          %485 = sbr.rel (%p483) target = $region64
        $region63: #{tpu_custom_call.1} parent=55 // pred_region
          %487 = dma.done %s480, 16
        $region64: #{tpu_custom_call.1} parent=55 // pred_fallthru
          _
        %s488 = sand.u32 %s37, 1
        %s489 = scalar_lea.sflag [#allocation6], %s488
        %s490 = sand.u32 %s111, 1
        %s491 = scalar_lea.vmem [#allocation7], %s490
        // Predicated region
        $region65: #{tpu_custom_call.1} parent=55 // pred_check
          %p492 = pneg %p124
        $region66: #{tpu_custom_call.1} parent=55 // pred_check_branch
          %494 = sbr.rel (%p492) target = $region68
        $region67: #{tpu_custom_call.1} parent=55 // pred_region
          %496 = dma.done %s489, 16
        $region68: #{tpu_custom_call.1} parent=55 // pred_fallthru
          _
        // Predicated region
        $region69: #{tpu_custom_call.1} parent=55 // pred_check
          %p497 = pneg %p145
        $region70: #{tpu_custom_call.1} parent=55 // pred_check_branch
          %499 = sbr.rel (%p497) target = $region72
        $region71: #{tpu_custom_call.1} parent=55 // pred_region
          %501 = dma.done [#allocation9], 1024
        $region72: #{tpu_custom_call.1} parent=55 // pred_fallthru
          _
        // Predicated region
        $region73: #{tpu_custom_call.1} parent=55 // pred_check
          %p502 = pneg %p166
        $region74: #{tpu_custom_call.1} parent=55 // pred_check_branch
          %504 = sbr.rel (%p502) target = $region76
        $region75: #{tpu_custom_call.1} parent=55 // pred_region
          %506 = dma.done [#allocation9], 1024
        $region76: #{tpu_custom_call.1} parent=55 // pred_fallthru
          _
        // Predicated region
        $region77: #{tpu_custom_call.1} parent=55 // pred_check
          %p507 = pneg %p187
        $region78: #{tpu_custom_call.1} parent=55 // pred_check_branch
          %509 = sbr.rel (%p507) target = $region80
        $region79: #{tpu_custom_call.1} parent=55 // pred_region
          %511 = dma.done [#allocation12], 1024
        $region80: #{tpu_custom_call.1} parent=55 // pred_fallthru
          _
        %s512 = sand.u32 %s59, 1
        %s513 = scalar_lea.sflag [#allocation3], %s512
        %s514 = sand.u32 %s59, 1
        %s515 = smul.addr %s514, 64
        %s516 = scalar_lea.vmem [#allocation2], %s515
        %p517 = pneg %p72
        %p518 = pneg %p69
        %s519 = sand.u32 %s37, 1
        %s520 = scalar_lea.sflag [#allocation6], %s519
        %s521 = sand.u32 %s85, 1
        %s522 = scalar_lea.vmem [#allocation5], %s521
        %p523 = pneg %p98
        %p524 = pneg %p95
        %s525 = sand.u32 %s37, 1
        %s526 = scalar_lea.sflag [#allocation6], %s525
        %s527 = sand.u32 %s111, 1
        %s528 = scalar_lea.vmem [#allocation7], %s527
        %p529 = pneg %p124
        %p530 = pneg %p121
        %p531 = pneg %p145
        %p532 = pneg %p142
        %p533 = pneg %p166
        %p534 = pneg %p163
        %p535 = pneg %p187
        %p536 = pneg %p184
        %p537 = pneg %p208
        %p538 = pneg %p205
        %p539 = pneg %p229
        %p540 = pneg %p226
        %p541 = pneg %p250
        %p542 = pneg %p247
        %p543 = pneg %p278
        %p544 = pneg %p275
        %s545 = sand.u32 %s265, 1
        %s546 = scalar_lea.sflag [#allocation4], %s545
        %s547 = sand.u32 %s265, 1
        %s548 = smul.addr %s547, 64
        %s549 = scalar_lea.vmem [#allocation13], %s548
        %p550 = pneg %p306
        %p551 = pneg %p303
        %s552 = sand.u32 %s37, 1
        %s553 = scalar_lea.sflag [#allocation15], %s552
        %s554 = sand.u32 %s293, 1
        %s555 = smul.addr %s554, 64
        %s556 = scalar_lea.vmem [#allocation14], %s555
        %p557 = pneg %p334
        %p558 = pneg %p331
        %s559 = sand.u32 %s37, 1
        %s560 = scalar_lea.sflag [#allocation15], %s559
        %s561 = sand.u32 %s321, 1
        %s562 = smul.addr %s561, 64
        %s563 = scalar_lea.vmem [#allocation16], %s562
        %s564 = smul.u32 8, %s42
        %s565 = smul.u32 8, %s42
        %s566 = smul.u32 8, %s42
        %s567 = smul.u32 8, %s42
        %v568 = vld [vmem:[%s473] sm:$0xff]
        %v569 = vld [vmem:[%s473 + $0x8] sm:$0xff]
        %v570 = vld [vmem:[%s473 + $0x10] sm:$0xff]
        %v571 = vld [vmem:[%s473 + $0x18] sm:$0xff]
        %v572 = vld [vmem:[%s473 + $0x20] sm:$0xff]
        %v573 = vld [vmem:[%s473 + $0x28] sm:$0xff]
        %v574 = vld [vmem:[%s473 + $0x30] sm:$0xff]
        %v575 = vld [vmem:[%s473 + $0x38] sm:$0xff]
        %v576 = vld [vmem:[%s482] sm:$0x1]
        %v578 = vperm.slane %v576, 0
        %v580 = vmul.f32 %v568, %v578
        %v581 = vmul.f32 %v569, %v578
        %v582 = vmul.f32 %v570, %v578
        %v583 = vmul.f32 %v571, %v578
        %v584 = vmul.f32 %v572, %v578
        %v585 = vmul.f32 %v573, %v578
        %v586 = vmul.f32 %v574, %v578
        %v587 = vmul.f32 %v575, %v578
        %v588 = vld [vmem:[%s491] sm:$0x1]
        %v590 = vperm.slane %v588, 0
        %v592 = vadd.f32 %v580, %v590
        %v593 = vadd.f32 %v581, %v590
        %v594 = vadd.f32 %v582, %v590
        %v595 = vadd.f32 %v583, %v590
        %v596 = vadd.f32 %v584, %v590
        %v597 = vadd.f32 %v585, %v590
        %v598 = vadd.f32 %v586, %v590
        %v599 = vadd.f32 %v587, %v590
        %v600 = vld [vmem:[#allocation8] sm:$0xff]
        %v601 = vld [vmem:[#allocation8 + $0x8] sm:$0xff]
        %v602 = vld [vmem:[#allocation8 + $0x10] sm:$0xff]
        %v603 = vld [vmem:[#allocation8 + $0x18] sm:$0xff]
        %v604 = vld [vmem:[#allocation8 + $0x20] sm:$0xff]
        %v605 = vld [vmem:[#allocation8 + $0x28] sm:$0xff]
        %v606 = vld [vmem:[#allocation8 + $0x30] sm:$0xff]
        %v607 = vld [vmem:[#allocation8 + $0x38] sm:$0xff]
        %v608 = vld [vmem:[%s6] sm:$0x1]
        %v610 = vperm.slane %v608, 0
        %vm612 = vcmask 523264
        %v614 = vsel %vm612, %v592, 0
        %v617 = vsel %vm612, %v593, 0
        %v620 = vsel %vm612, %v594, 0
        %v623 = vsel %vm612, %v595, 0
        %v626 = vsel %vm612, %v596, 0
        %v629 = vsel %vm612, %v597, 0
        %v632 = vsel %vm612, %v598, 0
        %v635 = vsel %vm612, %v599, 0
        %637 = vmatpush.msra.mxu0 0.0
        %638 = vmatpush.msra.mxu0 0.0
        %639 = vmatpush.msra.mxu0 0.0
        %640 = vmatpush.msra.mxu0 0.0
        %641 = vmatpush.msra.mxu0 0.0
        %642 = vmatpush.msra.mxu0 0.0
        %643 = vmatpush.msra.mxu0 0.0
        %644 = vmatpush.msra.mxu0 0.0
        %645 = vmatpush.msra.mxu0 %v607
        %646 = vmatpush.msra.mxu0 %v606
        %647 = vmatpush.msra.mxu0 %v605
        %648 = vmatpush.msra.mxu0 %v604
        %649 = vmatpush.msra.mxu0 %v603
        %650 = vmatpush.msra.mxu0 %v602
        %651 = vmatpush.msra.mxu0 %v601
        %652 = vmatpush.msra.mxu0 %v600
        %653 = vmatmul.f32.gmra.mxu0 %v614
        %v654 = vpop.f32.mrf.mxu0
        %v655 = vadd.f32 %v610, %v654
        %656 = vmatmul.f32.gmra.mxu0 %v617
        %v657 = vpop.f32.mrf.mxu0
        %v658 = vadd.f32 %v610, %v657
        %659 = vmatmul.f32.gmra.mxu0 %v620
        %v660 = vpop.f32.mrf.mxu0
        %v661 = vadd.f32 %v610, %v660
        %662 = vmatmul.f32.gmra.mxu0 %v623
        %v663 = vpop.f32.mrf.mxu0
        %v664 = vadd.f32 %v610, %v663
        %665 = vmatmul.f32.gmra.mxu0 %v626
        %v666 = vpop.f32.mrf.mxu0
        %v667 = vadd.f32 %v610, %v666
        %668 = vmatmul.f32.gmra.mxu0 %v629
        %v669 = vpop.f32.mrf.mxu0
        %v670 = vadd.f32 %v610, %v669
        %671 = vmatmul.f32.gmra.mxu0 %v632
        %v672 = vpop.f32.mrf.mxu0
        %v673 = vadd.f32 %v610, %v672
        %674 = vmatmul.f32.gmra.mxu0 %v635
        %v675 = vpop.f32.mrf.mxu0
        %v676 = vadd.f32 %v610, %v675
        %677 = vdwg.mxu0
        %678 = vst.msk [vmem:[%s549] sm:$0xff] %vm612, %v655
        %679 = vst.msk [vmem:[%s549 + $0x8] sm:$0xff] %vm612, %v658
        %680 = vst.msk [vmem:[%s549 + $0x10] sm:$0xff] %vm612, %v661
        %681 = vst.msk [vmem:[%s549 + $0x18] sm:$0xff] %vm612, %v664
        %682 = vst.msk [vmem:[%s549 + $0x20] sm:$0xff] %vm612, %v667
        %683 = vst.msk [vmem:[%s549 + $0x28] sm:$0xff] %vm612, %v670
        %684 = vst.msk [vmem:[%s549 + $0x30] sm:$0xff] %vm612, %v673
        %685 = vst.msk [vmem:[%s549 + $0x38] sm:$0xff] %vm612, %v676
        %v686 = vld [vmem:[#allocation10] sm:$0xff]
        %v687 = vld [vmem:[#allocation10 + $0x8] sm:$0xff]
        %v688 = vld [vmem:[#allocation10 + $0x10] sm:$0xff]
        %v689 = vld [vmem:[#allocation10 + $0x18] sm:$0xff]
        %v690 = vld [vmem:[#allocation10 + $0x20] sm:$0xff]
        %v691 = vld [vmem:[#allocation10 + $0x28] sm:$0xff]
        %v692 = vld [vmem:[#allocation10 + $0x30] sm:$0xff]
        %v693 = vld [vmem:[#allocation10 + $0x38] sm:$0xff]
        %v694 = vld [vmem:[%s7] sm:$0x1]
        %v696 = vperm.slane %v694, 0
        %698 = vmatpush.msra.mxu0 0.0
        %699 = vmatpush.msra.mxu0 0.0
        %700 = vmatpush.msra.mxu0 0.0
        %701 = vmatpush.msra.mxu0 0.0
        %702 = vmatpush.msra.mxu0 0.0
        %703 = vmatpush.msra.mxu0 0.0
        %704 = vmatpush.msra.mxu0 0.0
        %705 = vmatpush.msra.mxu0 0.0
        %706 = vmatpush.msra.mxu0 %v693
        %707 = vmatpush.msra.mxu0 %v692
        %708 = vmatpush.msra.mxu0 %v691
        %709 = vmatpush.msra.mxu0 %v690
        %710 = vmatpush.msra.mxu0 %v689
        %711 = vmatpush.msra.mxu0 %v688
        %712 = vmatpush.msra.mxu0 %v687
        %713 = vmatpush.msra.mxu0 %v686
        %714 = vmatmul.f32.gmra.mxu0 %v614
        %v715 = vpop.f32.mrf.mxu0
        %v716 = vadd.f32 %v696, %v715
        %717 = vmatmul.f32.gmra.mxu0 %v617
        %v718 = vpop.f32.mrf.mxu0
        %v719 = vadd.f32 %v696, %v718
        %720 = vmatmul.f32.gmra.mxu0 %v620
        %v721 = vpop.f32.mrf.mxu0
        %v722 = vadd.f32 %v696, %v721
        %723 = vmatmul.f32.gmra.mxu0 %v623
        %v724 = vpop.f32.mrf.mxu0
        %v725 = vadd.f32 %v696, %v724
        %726 = vmatmul.f32.gmra.mxu0 %v626
        %v727 = vpop.f32.mrf.mxu0
        %v728 = vadd.f32 %v696, %v727
        %729 = vmatmul.f32.gmra.mxu0 %v629
        %v730 = vpop.f32.mrf.mxu0
        %v731 = vadd.f32 %v696, %v730
        %732 = vmatmul.f32.gmra.mxu0 %v632
        %v733 = vpop.f32.mrf.mxu0
        %v734 = vadd.f32 %v696, %v733
        %735 = vmatmul.f32.gmra.mxu0 %v635
        %v736 = vpop.f32.mrf.mxu0
        %v737 = vadd.f32 %v696, %v736
        %738 = vdwg.mxu0
        %739 = vst.msk [vmem:[%s556] sm:$0xff] %vm612, %v716
        %740 = vst.msk [vmem:[%s556 + $0x8] sm:$0xff] %vm612, %v719
        %741 = vst.msk [vmem:[%s556 + $0x10] sm:$0xff] %vm612, %v722
        %742 = vst.msk [vmem:[%s556 + $0x18] sm:$0xff] %vm612, %v725
        %743 = vst.msk [vmem:[%s556 + $0x20] sm:$0xff] %vm612, %v728
        %744 = vst.msk [vmem:[%s556 + $0x28] sm:$0xff] %vm612, %v731
        %745 = vst.msk [vmem:[%s556 + $0x30] sm:$0xff] %vm612, %v734
        %746 = vst.msk [vmem:[%s556 + $0x38] sm:$0xff] %vm612, %v737
        %v747 = vld [vmem:[#allocation11] sm:$0xff]
        %v748 = vld [vmem:[#allocation11 + $0x8] sm:$0xff]
        %v749 = vld [vmem:[#allocation11 + $0x10] sm:$0xff]
        %v750 = vld [vmem:[#allocation11 + $0x18] sm:$0xff]
        %v751 = vld [vmem:[#allocation11 + $0x20] sm:$0xff]
        %v752 = vld [vmem:[#allocation11 + $0x28] sm:$0xff]
        %v753 = vld [vmem:[#allocation11 + $0x30] sm:$0xff]
        %v754 = vld [vmem:[#allocation11 + $0x38] sm:$0xff]
        %v755 = vld [vmem:[%s8] sm:$0x1]
        %v757 = vperm.slane %v755, 0
        %759 = vmatpush.msra.mxu0 0.0
        %760 = vmatpush.msra.mxu0 0.0
        %761 = vmatpush.msra.mxu0 0.0
        %762 = vmatpush.msra.mxu0 0.0
        %763 = vmatpush.msra.mxu0 0.0
        %764 = vmatpush.msra.mxu0 0.0
        %765 = vmatpush.msra.mxu0 0.0
        %766 = vmatpush.msra.mxu0 0.0
        %767 = vmatpush.msra.mxu0 %v754
        %768 = vmatpush.msra.mxu0 %v753
        %769 = vmatpush.msra.mxu0 %v752
        %770 = vmatpush.msra.mxu0 %v751
        %771 = vmatpush.msra.mxu0 %v750
        %772 = vmatpush.msra.mxu0 %v749
        %773 = vmatpush.msra.mxu0 %v748
        %774 = vmatpush.msra.mxu0 %v747
        %775 = vmatmul.f32.gmra.mxu0 %v614
        %v776 = vpop.f32.mrf.mxu0
        %v777 = vadd.f32 %v757, %v776
        %778 = vmatmul.f32.gmra.mxu0 %v617
        %v779 = vpop.f32.mrf.mxu0
        %v780 = vadd.f32 %v757, %v779
        %781 = vmatmul.f32.gmra.mxu0 %v620
        %v782 = vpop.f32.mrf.mxu0
        %v783 = vadd.f32 %v757, %v782
        %784 = vmatmul.f32.gmra.mxu0 %v623
        %v785 = vpop.f32.mrf.mxu0
        %v786 = vadd.f32 %v757, %v785
        %787 = vmatmul.f32.gmra.mxu0 %v626
        %v788 = vpop.f32.mrf.mxu0
        %v789 = vadd.f32 %v757, %v788
        %790 = vmatmul.f32.gmra.mxu0 %v629
        %v791 = vpop.f32.mrf.mxu0
        %v792 = vadd.f32 %v757, %v791
        %793 = vmatmul.f32.gmra.mxu0 %v632
        %v794 = vpop.f32.mrf.mxu0
        %v795 = vadd.f32 %v757, %v794
        %796 = vmatmul.f32.gmra.mxu0 %v635
        %v797 = vpop.f32.mrf.mxu0
        %v798 = vadd.f32 %v757, %v797
        %799 = vdwg.mxu0
        %800 = vst.msk [vmem:[%s563] sm:$0xff] %vm612, %v777
        %801 = vst.msk [vmem:[%s563 + $0x8] sm:$0xff] %vm612, %v780
        %802 = vst.msk [vmem:[%s563 + $0x10] sm:$0xff] %vm612, %v783
        %803 = vst.msk [vmem:[%s563 + $0x18] sm:$0xff] %vm612, %v786
        %804 = vst.msk [vmem:[%s563 + $0x20] sm:$0xff] %vm612, %v789
        %805 = vst.msk [vmem:[%s563 + $0x28] sm:$0xff] %vm612, %v792
        %806 = vst.msk [vmem:[%s563 + $0x30] sm:$0xff] %vm612, %v795
        %807 = vst.msk [vmem:[%s563 + $0x38] sm:$0xff] %vm612, %v798
        %s808 = sand.u32 %s265, 1
        %s809 = scalar_lea.sflag [#allocation4], %s808
        %s810 = sand.u32 %s265, 1
        %s811 = smul.addr %s810, 64
        %s812 = scalar_lea.vmem [#allocation13], %s811
        %s813 = sand.u32 %s37, 1
        %s814 = scalar_lea.sflag [#allocation15], %s813
        %s815 = sand.u32 %s293, 1
        %s816 = smul.addr %s815, 64
        %s817 = scalar_lea.vmem [#allocation14], %s816
        %s818 = sand.u32 %s37, 1
        %s819 = scalar_lea.sflag [#allocation15], %s818
        %s820 = sand.u32 %s321, 1
        %s821 = smul.addr %s820, 64
        %s822 = scalar_lea.vmem [#allocation16], %s821
        // Predicated region
        $region81: #{tpu_custom_call.1} parent=55 // pred_check
          %p823 = pneg %p275
        $region82: #{tpu_custom_call.1} parent=55 // pred_check_branch
          %825 = sbr.rel (%p823) target = $region84
        $region83: #{tpu_custom_call.1} parent=55 // pred_region
          %s826 = smul.u32 8, %s42
          %828 = vsyncadd %s809, 0
          %s829 = smul.addr %s41, 8
          %s830 = sadd.s32 %s826, %s829
          %s831 = smul.addr %s830, 8
          %s832 = scalar_lea.hbm %s9, %s831
          %s833 = sshll.u32 %s812, 4
          %s834 = int_to_ptr.vmem [resolvable:$true] %s833
          %s835 = sshll.u32 %s832, 4
          %s836 = int_to_ptr.hbm [resolvable:$true] %s835
          %841 = dma.vmem_to_hbm [thread:$0]  %s834, 1024, %s836, %s809, 128, 128, 8
        $region84: #{tpu_custom_call.1} parent=55 // pred_fallthru
          _
        // Predicated region
        $region85: #{tpu_custom_call.1} parent=55 // pred_check
          %p842 = pneg %p303
        $region86: #{tpu_custom_call.1} parent=55 // pred_check_branch
          %844 = sbr.rel (%p842) target = $region88
        $region87: #{tpu_custom_call.1} parent=55 // pred_region
          %s845 = smul.u32 8, %s42
          %847 = vsyncadd %s814, 0
          %s848 = smul.addr %s41, 8
          %s849 = sadd.s32 %s845, %s848
          %s850 = smul.addr %s849, 8
          %s851 = scalar_lea.hbm %s10, %s850
          %s852 = sshll.u32 %s817, 4
          %s853 = int_to_ptr.vmem [resolvable:$true] %s852
          %s854 = sshll.u32 %s851, 4
          %s855 = int_to_ptr.hbm [resolvable:$true] %s854
          %860 = dma.vmem_to_hbm [thread:$0]  %s853, 1024, %s855, %s814, 128, 128, 8
        $region88: #{tpu_custom_call.1} parent=55 // pred_fallthru
          _
        // Predicated region
        $region89: #{tpu_custom_call.1} parent=55 // pred_check
          %p861 = pneg %p331
        $region90: #{tpu_custom_call.1} parent=55 // pred_check_branch
          %863 = sbr.rel (%p861) target = $region92
        $region91: #{tpu_custom_call.1} parent=55 // pred_region
          %s864 = smul.u32 8, %s42
          %866 = vsyncadd %s819, 0
          %s867 = smul.addr %s41, 8
          %s868 = sadd.s32 %s864, %s867
          %s869 = smul.addr %s868, 8
          %s870 = scalar_lea.hbm %s11, %s869
          %s871 = sshll.u32 %s822, 4
          %s872 = int_to_ptr.vmem [resolvable:$true] %s871
          %s873 = sshll.u32 %s870, 4
          %s874 = int_to_ptr.hbm [resolvable:$true] %s873
          %879 = dma.vmem_to_hbm [thread:$0]  %s872, 1024, %s874, %s819, 128, 128, 8
        $region92: #{tpu_custom_call.1} parent=55 // pred_fallthru
          _
      $region56: #{tpu_custom_call.1} parent=5 // pred_fallthru
        _
      %p880 = scmp.le.s32.totalorder 2, %s32
      // Predicated region
      $region93: #{tpu_custom_call.1} parent=5 // pred_check
        %p881 = pneg %p880
      $region94: #{tpu_custom_call.1} parent=5 // pred_check_branch
        %883 = sbr.rel (%p881) target = $region96
      $region95: #{tpu_custom_call.1} parent=5 // pred_region
        %s884 = ssub.s32 %s32, 2
        // Predicated region
        $region97: #{tpu_custom_call.1} parent=95 // pred_check
          %p885 = pneg %p281
        $region98: #{tpu_custom_call.1} parent=95 // pred_check_branch
          %887 = sbr.rel (%p885) target = $region100
        $region99: #{tpu_custom_call.1} parent=95 // pred_region
          %s888 = sand.u32 %s266, 1
          %s889 = scalar_lea.sflag [#allocation4], %s888
          %s890 = sand.u32 %s266, 1
          %s891 = smul.addr %s890, 64
          %s892 = scalar_lea.vmem [#allocation13], %s891
          %894 = dma.done %s889, 1024
        $region100: #{tpu_custom_call.1} parent=95 // pred_fallthru
          _
        // Predicated region
        $region101: #{tpu_custom_call.1} parent=95 // pred_check
          %p895 = pneg %p309
        $region102: #{tpu_custom_call.1} parent=95 // pred_check_branch
          %897 = sbr.rel (%p895) target = $region104
        $region103: #{tpu_custom_call.1} parent=95 // pred_region
          %s898 = sand.u32 %s38, 1
          %s899 = scalar_lea.sflag [#allocation15], %s898
          %s900 = sand.u32 %s294, 1
          %s901 = smul.addr %s900, 64
          %s902 = scalar_lea.vmem [#allocation14], %s901
          %904 = dma.done %s899, 1024
        $region104: #{tpu_custom_call.1} parent=95 // pred_fallthru
          _
        // Predicated region
        $region105: #{tpu_custom_call.1} parent=95 // pred_check
          %p905 = pneg %p337
        $region106: #{tpu_custom_call.1} parent=95 // pred_check_branch
          %907 = sbr.rel (%p905) target = $region108
        $region107: #{tpu_custom_call.1} parent=95 // pred_region
          %s908 = sand.u32 %s38, 1
          %s909 = scalar_lea.sflag [#allocation15], %s908
          %s910 = sand.u32 %s322, 1
          %s911 = smul.addr %s910, 64
          %s912 = scalar_lea.vmem [#allocation16], %s911
          %914 = dma.done %s909, 1024
        $region108: #{tpu_custom_call.1} parent=95 // pred_fallthru
          _
      $region96: #{tpu_custom_call.1} parent=5 // pred_fallthru
        _
    $region6: #{tpu_custom_call.1} parent=1 // loop_footer
      %s36 = sadd.s32 1, %s32
    $region7: #{tpu_custom_call.1} parent=1 // loop_footer_branch
      %31 = sbr.rel target = $region3
    $region8: #{tpu_custom_call.1} parent=1 // loop_exit
      _
    %915 = vsyncpa [#allocation3], 1
    %s916 = scalar_lea.sflag [#allocation3], 1
    %917 = vsyncpa %s916, 1
    %918 = vsyncpa [#allocation6], 1
    %s919 = scalar_lea.sflag [#allocation6], 1
    %920 = vsyncpa %s919, 1
    %921 = vsyncpa [#allocation9], 1
    %922 = vsyncpa [#allocation12], 1
    %923 = vsyncpa [#allocation4], 1
    %s924 = scalar_lea.sflag [#allocation4], 1
    %925 = vsyncpa %s924, 1
    %926 = vsyncpa [#allocation15], 1
    %s927 = scalar_lea.sflag [#allocation15], 1
    %928 = vsyncpa %s927, 1

</llo_original>
